<compile_context>
chip_gen: v6e
topology: v6e:2x2x1
jax: 0.10.0
libtpu: 0.0.40
codegen_flags: <defaults>
</compile_context>

<pallas_src>
import functools

import jax
import jax.numpy as jnp
from jax import lax
from jax.experimental import pallas as pl
from jax.experimental.pallas import tpu as pltpu


def _round_up(x, m):
    return (x + m - 1) // m * m


def _skip_lstm_kernel(x_ref, w0_ref, wih_ref, whh_ref, b0_ref, wf_ref, bf_ref,
                      y_ref,
                      gin_sc, hseq_sc, h_sc, c_sc,
                      *, chunk_len, batch_sh, unroll):
    """One (shard, time-chunk) grid step of the SkipLSTM forward.

    x_ref   : (TS*Bsh, I)  bf16   chunk of time-major input, row = s*Bsh + b
    w0_ref  : (L, I, 4H)   bf16   folded wi @ wih (i/f/o cols pre-scaled 0.5)
    wih_ref : (L, H, 4H)   bf16   hseq_{l-1} -> gates (scaled)
    whh_ref : (L, H, 4H)   bf16   h -> gates (scaled)
    b0_ref  : (L, 1, 4H)   f32    bi @ wih + bl (scaled)
    wf_ref  : (L, H, Op)   bf16   output projection (lane-padded)
    bf_ref  : (L, 1, Op)   f32    projection bias; last layer includes skip bias
    y_ref   : (TS*Bsh, Op) f32    running-skip output chunk (lane-dense)
    gin_sc  : (TS*Bsh, 4H) f32    per-chunk time-invariant gate inputs
    hseq_sc : (TS*Bsh, H)  f32    current layer's hidden sequence (feeds l+1)
    h_sc    : (L, Bsh, H)  f32    carried hidden state (persists across chunks)
    c_sc    : (L, Bsh, H)  f32    carried cell state   (persists across chunks)
    """
    L = w0_ref.shape[0]
    H = whh_ref.shape[1]
    Bp = batch_sh
    t = pl.program_id(1)

    # hs=None in the module -> zero-init state at the start of each shard.
    @pl.when(t == 0)
    def _():
        h_sc[...] = jnp.zeros_like(h_sc)
        c_sc[...] = jnp.zeros_like(c_sc)

    x_bf = x_ref[...]                               # already bf16
    acc = None                                      # running-skip accumulator (regs)

    for l in range(L):                              # static layer loop, weights resident
        w0 = w0_ref[l]                              # (I, 4H)   bf16
        whh = whh_ref[l]                            # (H, 4H)   bf16
        b0 = b0_ref[l]                              # (1, 4H)   f32
        wf = wf_ref[l]                              # (H, Op)   bf16
        bfl = bf_ref[l]                             # (1, Op)   f32

        # ---- hoisted, time-invariant gate pre-activations for the chunk ----
        gin = jnp.dot(x_bf, w0, preferred_element_type=jnp.float32) + b0
        if l > 0:
            # skip connection from the previous layer's hidden sequence
            gin = gin + jnp.dot(hseq_sc[...].astype(jnp.bfloat16), wih_ref[l],
                                preferred_element_type=jnp.float32)
        gin_sc[...] = gin

        # ---- serial recurrence: only h @ whh + single-tanh gate math --------
        def step(s, carry, whh=whh):
            h, c = carry
            r0 = pl.multiple_of(s * Bp, Bp)         # tile-aligned row group
            gates = (gin_sc[pl.ds(r0, Bp), :]
                     + jnp.dot(h.astype(jnp.bfloat16), whh,
                               preferred_element_type=jnp.float32))   # (Bp, 4H)
            th = jnp.tanh(gates)                    # one EUP pass (0.5 folded in)
            i_g = 0.5 * th[:, 0 * H:1 * H] + 0.5    # sigmoid via tanh identity
            f_g = 0.5 * th[:, 1 * H:2 * H] + 0.5
            g_g = th[:, 2 * H:3 * H]
            o_g = 0.5 * th[:, 3 * H:4 * H] + 0.5
            c_new = f_g * c + i_g * g_g
            h_new = o_g * jnp.tanh(c_new)
            hseq_sc[pl.ds(r0, Bp), :] = h_new       # feeds layer l+1 / projection
            return (h_new, c_new)

        hN, cN = lax.fori_loop(0, chunk_len, step, (h_sc[l], c_sc[l]),
                               unroll=unroll)
        h_sc[l] = hN                                # carry state to next chunk
        c_sc[l] = cN

        # ---- batched output projection, accumulated off the serial chain ----
        proj = jnp.dot(hseq_sc[...].astype(jnp.bfloat16), wf,
                       preferred_element_type=jnp.float32) + bfl
        acc = proj if acc is None else acc + proj

    y_ref[...] = acc                                # single lane-dense store per chunk


def skip_lstm_forward(x_bsi, params, *, time_chunk=32):
    """Runs the Pallas SkipLSTM forward.  x_bsi: (B, S, input_size) -> (B, S, O)."""
    B, S, I = x_bsi.shape
    L, _, H = params["wi"].shape
    O = params["wf"].shape[-1]
    Op = _round_up(O, 128)                          # lane-dense output

    # Batch sharding across TensorCores (v7x has 2 TCs). Degenerates to one
    # shard for small batches; on single-TC chips the shards just serialize.
    n_shards = 2 if _round_up(B, 8) >= 16 else 1
    Bsh = _round_up(-(-B // n_shards), 8)           # per-shard padded batch
    Bp = n_shards * Bsh

    TS = max(2, min(time_chunk, S))                 # time chunk (even -> bf16 tiling safe)
    if TS % 2:
        TS += 1
    Sp = _round_up(S, TS)
    n_chunks = Sp // TS
    rows = TS * Bsh                                 # rows per chunk block

    # ---- host-side constant folding (weights only) ---------------------------
    f32 = jnp.float32
    wi, bi = params["wi"].astype(f32), params["bi"].astype(f32)
    wih, whh = params["wih"].astype(f32), params["whh"].astype(f32)
    bl = params["bl"].astype(f32)
    wf, bf, bias = params["wf"].astype(f32), params["bf"].astype(f32), params["bias"].astype(f32)

    w0 = jnp.einsum("lih,lhg->lig", wi, wih)        # (L, I, 4H)
    b0 = jnp.einsum("lxh,lhg->lxg", bi, wih) + bl   # (L, 1, 4H)

    # sigmoid(g) = 0.5*tanh(g/2) + 0.5  ->  fold the 0.5 into i/f/o gate columns
    gate_scale = jnp.concatenate(
        [jnp.full((H,), 0.5, f32), jnp.full((H,), 0.5, f32),
         jnp.ones((H,), f32), jnp.full((H,), 0.5, f32)])
    w0_b = (w0 * gate_scale).astype(jnp.bfloat16)
    wih_b = (wih * gate_scale).astype(jnp.bfloat16)
    whh_b = (whh * gate_scale).astype(jnp.bfloat16)
    b0_f = b0 * gate_scale

    wf_b = jnp.pad(wf, ((0, 0), (0, 0), (0, Op - O))).astype(jnp.bfloat16)
    bf_f = jnp.pad(bf, ((0, 0), (0, 0), (0, Op - O)))
    bf_f = bf_f.at[L - 1].add(bias[0])              # fold scalar skip bias

    # ---- input layout: row = shard*(Sp*Bsh) + t*Bsh + b_local ---------------
    x = jnp.transpose(x_bsi.astype(f32), (1, 0, 2))             # (S, B, I)
    x = jnp.pad(x, ((0, Sp - S), (0, Bp - B), (0, 0)))          # (Sp, Bp, I)
    x = x.reshape(Sp, n_shards, Bsh, I).transpose(1, 0, 2, 3)   # (shard, Sp, Bsh, I)
    x2 = x.reshape(n_shards * Sp * Bsh, I).astype(jnp.bfloat16)

    # ---- VMEM budget (v7x-safe: capped at its 64 MiB physical ceiling) -------
    weight_arrs = (w0_b, wih_b, whh_b, b0_f, wf_b, bf_f)
    w_bytes = sum(int(a.size) * a.dtype.itemsize for a in weight_arrs)
    vmem_need = (2 * w_bytes                        # weights (worst-case 2x buffers)
                 + 2 * rows * I * 2                 # x chunk, bf16, double-buffered
                 + 2 * rows * Op * 4                # y chunk, f32, double-buffered
                 + rows * (4 * H + H) * 4           # gin + hseq scratch
                 + 2 * L * Bsh * H * 4)             # h / c carried state
    vmem_limit = int(min(max(2 * vmem_need, 16 << 20), 64 << 20))

    kernel = functools.partial(_skip_lstm_kernel, chunk_len=TS, batch_sh=Bsh,
                               unroll=min(TS, 8))   # bounded unroll of the recurrence

    def _full(a):                                   # whole array resident in VMEM
        nd = a.ndim
        return pl.BlockSpec(a.shape, lambda p, t, nd=nd: (0,) * nd)

    y2 = pl.pallas_call(
        kernel,
        out_shape=jax.ShapeDtypeStruct((n_shards * Sp * Bsh, Op), f32),
        grid=(n_shards, n_chunks),
        in_specs=[
            pl.BlockSpec((rows, I), lambda p, t: (p * n_chunks + t, 0)),
            _full(w0_b), _full(wih_b), _full(whh_b), _full(b0_f),
            _full(wf_b), _full(bf_f),
        ],
        out_specs=pl.BlockSpec((rows, Op), lambda p, t: (p * n_chunks + t, 0)),
        scratch_shapes=[
            pltpu.VMEM((rows, 4 * H), f32),         # per-chunk gate inputs
            pltpu.VMEM((rows, H), f32),             # current-layer hidden sequence
            pltpu.VMEM((L, Bsh, H), f32),           # carried h state
            pltpu.VMEM((L, Bsh, H), f32),           # carried c state
        ],
        compiler_params=pltpu.CompilerParams(
            dimension_semantics=("parallel", "arbitrary"),
            vmem_limit_bytes=vmem_limit),
    )(x2, w0_b, wih_b, whh_b, b0_f, wf_b, bf_f)

    # ---- drop padding / un-shard ---------------------------------------------
    y = y2.reshape(n_shards, Sp, Bsh, Op)
    y = jnp.transpose(y, (1, 0, 2, 3)).reshape(Sp, n_shards * Bsh, Op)
    y = y[:S, :B, :O]
    return jnp.transpose(y, (1, 0, 2))              # (B, S, O)


class PredModelPallas:
    """JAX/Pallas equivalent of PredModel.forward (with_texts=False)."""
    # TODO(synk): the with_texts=True branch (LSTMCell + Gaussian window
    # attention over `seqs`) is not exercised by the default forward and is
    # not implemented here.

    def __init__(self, input_size, layers, num_mixtures, hidden_dim, key):
        self.num_layers = layers
        self.hidden_dim = hidden_dim
        self.output_dim = 1 + 6 * num_mixtures
        H, O, I, L = hidden_dim, self.output_dim, input_size, layers
        ks = jax.random.split(key, 9)
        f32 = jnp.float32
        # Deterministic synthetic init (module uses xavier for weights,
        # zeros for 1-D params; exact distribution is not required here).
        self.params = {
            "wi":  0.2 * jax.random.normal(ks[0], (L, I, H), f32),
            "bi":  0.01 * jax.random.normal(ks[1], (L, 1, H), f32),
            "wih": 0.2 * jax.random.normal(ks[2], (L, H, 4 * H), f32),
            "whh": 0.2 * jax.random.normal(ks[3], (L, H, 4 * H), f32),
            "bl":  0.01 * jax.random.normal(ks[4], (L, 1, 4 * H), f32),
            "wf":  0.2 * jax.random.normal(ks[5], (L, H, O), f32),
            "bf":  0.01 * jax.random.normal(ks[6], (L, 1, O), f32),
            "bias": 0.01 * jax.random.normal(ks[7], (1,), f32),
        }

    def __call__(self, x):
        return skip_lstm_forward(x, self.params)


def _reference_forward(x, p):
    """Pure-JAX f32 reference reproducing SkipLSTM.forward semantics."""
    B, S, _ = x.shape
    L, _, H = p["wi"].shape
    O = p["wf"].shape[-1]
    y = jnp.zeros((B, S, O), jnp.float32)
    last = jnp.zeros((B, S, H), jnp.float32)
    for l in range(L):
        inp = x @ p["wi"][l] + p["bi"][l] + last                   # (B,S,H)

        def step(carry, x_t, l=l):
            h, c = carry
            g = x_t @ p["wih"][l] + h @ p["whh"][l] + p["bl"][l]
            i_g = jax.nn.sigmoid(g[:, 0 * H:1 * H])
            f_g = jax.nn.sigmoid(g[:, 1 * H:2 * H])
            g_g = jnp.tanh(g[:, 2 * H:3 * H])
            o_g = jax.nn.sigmoid(g[:, 3 * H:4 * H])
            c_n = f_g * c + i_g * g_g
            h_n = o_g * jnp.tanh(c_n)
            return (h_n, c_n), h_n

        init = (jnp.zeros((B, H), jnp.float32), jnp.zeros((B, H), jnp.float32))
        _, hs = lax.scan(step, init, jnp.transpose(inp, (1, 0, 2)))
        hseq = jnp.transpose(hs, (1, 0, 2))                        # (B,S,H)
        last = hseq
        y = y + hseq @ p["wf"][l] + p["bf"][l]
    return y + p["bias"][0]


if __name__ == "__main__":
    key = jax.random.PRNGKey(0)
    k_param, k_x = jax.random.split(key)

    # PredModel(input_size=3, layers=2, num_mixtures=5, batch_size=2, hidden_dim=32)
    B, S, I, H, L, M = 2, 8, 3, 32, 2, 5
    model = PredModelPallas(input_size=I, layers=L, num_mixtures=M,
                            hidden_dim=H, key=k_param)

    x = jax.random.normal(k_x, (B, S, I), jnp.float32)

    y = model(x)
    y = jax.block_until_ready(y)

    assert y.shape == (B, S, 1 + 6 * M), y.shape

    # bf16 MXU operands -> relaxed tolerance vs the f32 reference.
    y_ref = _reference_forward(x, model.params)
    if not jnp.allclose(y, y_ref, atol=3e-2, rtol=3e-2):
        raise RuntimeError(
            f"Pallas kernel mismatch vs reference, max err "
            f"{jnp.max(jnp.abs(y - y_ref))}")

    print("KERNEL_OK")
</pallas_src>

<mosaic_0001>
module attributes {stable_mosaic.version = 11 : i64} {
  func.func @_skip_lstm_kernel(%arg0: i32, %arg1: i32, %arg2: memref<64x3xbf16, #tpu.memory_space<vmem>>, %arg3: memref<2x3x128xbf16, #tpu.memory_space<vmem>>, %arg4: memref<2x32x128xbf16, #tpu.memory_space<vmem>>, %arg5: memref<2x32x128xbf16, #tpu.memory_space<vmem>>, %arg6: memref<2x1x128xf32, #tpu.memory_space<vmem>>, %arg7: memref<2x32x128xbf16, #tpu.memory_space<vmem>>, %arg8: memref<2x1x128xf32, #tpu.memory_space<vmem>>, %arg9: memref<64x128xf32, #tpu.memory_space<vmem>>, %arg10: memref<64x128xf32, #tpu.memory_space<vmem>>, %arg11: memref<64x32xf32, #tpu.memory_space<vmem>>, %arg12: memref<2x8x32xf32, #tpu.memory_space<vmem>>, %arg13: memref<2x8x32xf32, #tpu.memory_space<vmem>>) attributes {dimension_semantics = [#tpu.dimension_semantics<parallel>, #tpu.dimension_semantics<arbitrary>], iteration_bounds = array<i64: 1, 1>, scalar_prefetch = 0 : i64, scratch_operands = 4 : i64, tpu.core_type = #tpu.core_type<tc>, window_params = [{transform_indices = @transform_0, window_bounds = array<i64: 64, 3>}, {pipeline_mode = #tpu.pipeline_mode<synchronous>, transform_indices = @transform_1, window_bounds = array<i64: 2, 3, 128>}, {pipeline_mode = #tpu.pipeline_mode<synchronous>, transform_indices = @transform_2, window_bounds = array<i64: 2, 32, 128>}, {pipeline_mode = #tpu.pipeline_mode<synchronous>, transform_indices = @transform_3, window_bounds = array<i64: 2, 32, 128>}, {pipeline_mode = #tpu.pipeline_mode<synchronous>, transform_indices = @transform_4, window_bounds = array<i64: 2, 1, 128>}, {pipeline_mode = #tpu.pipeline_mode<synchronous>, transform_indices = @transform_5, window_bounds = array<i64: 2, 32, 128>}, {pipeline_mode = #tpu.pipeline_mode<synchronous>, transform_indices = @transform_6, window_bounds = array<i64: 2, 1, 128>}, {transform_indices = @transform_7, window_bounds = array<i64: 64, 128>}]} {
    %c0_i32 = arith.constant 0 : i32
    %0 = arith.cmpi eq, %arg1, %c0_i32 : i32
    %1 = arith.extui %0 : i1 to i32
    %c0_i32_0 = arith.constant 0 : i32
    %2 = arith.cmpi ne, %1, %c0_i32_0 : i32
    scf.if %2 {
      %cst_244 = arith.constant 0.000000e+00 : f32
      %566 = vector.broadcast %cst_244 : f32 to vector<2x8x32xf32>
      %c0_245 = arith.constant 0 : index
      %c0_246 = arith.constant 0 : index
      %c0_247 = arith.constant 0 : index
      %567 = vector.load %arg12[%c0_245, %c0_246, %c0_247] : memref<2x8x32xf32, #tpu.memory_space<vmem>>, vector<2x8x32xf32>
      tpu.vector_store %arg12[%c0_245, %c0_246, %c0_247], %566 {strides = array<i32>} : memref<2x8x32xf32, #tpu.memory_space<vmem>>, vector<2x8x32xf32>,
      %cst_248 = arith.constant 0.000000e+00 : f32
      %568 = vector.broadcast %cst_248 : f32 to vector<2x8x32xf32>
      %c0_249 = arith.constant 0 : index
      %c0_250 = arith.constant 0 : index
      %c0_251 = arith.constant 0 : index
      %569 = vector.load %arg13[%c0_249, %c0_250, %c0_251] : memref<2x8x32xf32, #tpu.memory_space<vmem>>, vector<2x8x32xf32>
      tpu.vector_store %arg13[%c0_249, %c0_250, %c0_251], %568 {strides = array<i32>} : memref<2x8x32xf32, #tpu.memory_space<vmem>>, vector<2x8x32xf32>,
    } else {
    }
    %c0 = arith.constant 0 : index
    %c0_1 = arith.constant 0 : index
    %3 = vector.load %arg2[%c0, %c0_1] : memref<64x3xbf16, #tpu.memory_space<vmem>>, vector<64x3xbf16>
    %c0_2 = arith.constant 0 : index
    %c0_3 = arith.constant 0 : index
    %c0_4 = arith.constant 0 : index
    %4 = vector.load %arg3[%c0_2, %c0_3, %c0_4] : memref<2x3x128xbf16, #tpu.memory_space<vmem>>, vector<1x3x128xbf16>
    %5 = vector.shape_cast %4 : vector<1x3x128xbf16> to vector<3x128xbf16>
    %c0_5 = arith.constant 0 : index
    %c0_6 = arith.constant 0 : index
    %c0_7 = arith.constant 0 : index
    %6 = vector.load %arg5[%c0_5, %c0_6, %c0_7] : memref<2x32x128xbf16, #tpu.memory_space<vmem>>, vector<1x32x128xbf16>
    %7 = vector.shape_cast %6 : vector<1x32x128xbf16> to vector<32x128xbf16>
    %c0_8 = arith.constant 0 : index
    %c0_9 = arith.constant 0 : index
    %c0_10 = arith.constant 0 : index
    %8 = vector.load %arg6[%c0_8, %c0_9, %c0_10] : memref<2x1x128xf32, #tpu.memory_space<vmem>>, vector<1x1x128xf32>
    %9 = vector.shape_cast %8 : vector<1x1x128xf32> to vector<1x128xf32>
    %c0_11 = arith.constant 0 : index
    %c0_12 = arith.constant 0 : index
    %c0_13 = arith.constant 0 : index
    %10 = vector.load %arg7[%c0_11, %c0_12, %c0_13] : memref<2x32x128xbf16, #tpu.memory_space<vmem>>, vector<1x32x128xbf16>
    %11 = vector.shape_cast %10 : vector<1x32x128xbf16> to vector<32x128xbf16>
    %c0_14 = arith.constant 0 : index
    %c0_15 = arith.constant 0 : index
    %c0_16 = arith.constant 0 : index
    %12 = vector.load %arg8[%c0_14, %c0_15, %c0_16] : memref<2x1x128xf32, #tpu.memory_space<vmem>>, vector<1x1x128xf32>
    %13 = vector.shape_cast %12 : vector<1x1x128xf32> to vector<1x128xf32>
    %cst = arith.constant dense<0.000000e+00> : vector<64x128xf32>
    %14 = tpu.matmul %3, %5, %cst {dimension_numbers = #tpu.dot_dimension_numbers<[1], [0], [0], [1], [0, 0, 1, 1], [], []>} : vector<64x3xbf16>, vector<3x128xbf16>, vector<64x128xf32> -> vector<64x128xf32>
    %15 = vector.broadcast %9 : vector<1x128xf32> to vector<64x128xf32>
    %16 = arith.addf %14, %15 : vector<64x128xf32>
    %c0_17 = arith.constant 0 : index
    %c0_18 = arith.constant 0 : index
    %17 = vector.load %arg10[%c0_17, %c0_18] : memref<64x128xf32, #tpu.memory_space<vmem>>, vector<64x128xf32>
    tpu.vector_store %arg10[%c0_17, %c0_18], %16 {strides = array<i32>} : memref<64x128xf32, #tpu.memory_space<vmem>>, vector<64x128xf32>,
    %c0_19 = arith.constant 0 : index
    %c0_20 = arith.constant 0 : index
    %c0_21 = arith.constant 0 : index
    %18 = vector.load %arg12[%c0_19, %c0_20, %c0_21] : memref<2x8x32xf32, #tpu.memory_space<vmem>>, vector<1x8x32xf32>
    %19 = vector.shape_cast %18 : vector<1x8x32xf32> to vector<8x32xf32>
    %c0_22 = arith.constant 0 : index
    %c0_23 = arith.constant 0 : index
    %c0_24 = arith.constant 0 : index
    %20 = vector.load %arg13[%c0_22, %c0_23, %c0_24] : memref<2x8x32xf32, #tpu.memory_space<vmem>>, vector<1x8x32xf32>
    %21 = vector.shape_cast %20 : vector<1x8x32xf32> to vector<8x32xf32>
    %c0_i32_25 = arith.constant 0 : i32
    %c8_i32 = arith.constant 8 : i32
    %22 = arith.muli %c0_i32_25, %c8_i32 : i32
    %23 = tpu.assume_multiple %22, 8 : i32
    %24 = arith.index_cast %23 : i32 to index
    %c0_26 = arith.constant 0 : index
    %25 = vector.load %arg10[%24, %c0_26] : memref<64x128xf32, #tpu.memory_space<vmem>>, vector<8x128xf32>
    %26 = arith.truncf %19 : vector<8x32xf32> to vector<8x32xbf16>
    %cst_27 = arith.constant dense<0.000000e+00> : vector<8x128xf32>
    %27 = tpu.matmul %26, %7, %cst_27 {dimension_numbers = #tpu.dot_dimension_numbers<[1], [0], [0], [1], [0, 0, 1, 1], [], []>} : vector<8x32xbf16>, vector<32x128xbf16>, vector<8x128xf32> -> vector<8x128xf32>
    %28 = arith.addf %25, %27 : vector<8x128xf32>
    %29 = math.tanh %28 : vector<8x128xf32>
    %30 = vector.extract_strided_slice %29 {offsets = [0, 0], sizes = [8, 32], strides = [1, 1]} : vector<8x128xf32> to vector<8x32xf32>
    %cst_28 = arith.constant 5.000000e-01 : f32
    %31 = vector.broadcast %cst_28 : f32 to vector<8x32xf32>
    %32 = arith.mulf %31, %30 : vector<8x32xf32>
    %cst_29 = arith.constant 5.000000e-01 : f32
    %33 = vector.broadcast %cst_29 : f32 to vector<8x32xf32>
    %34 = arith.addf %32, %33 : vector<8x32xf32>
    %35 = vector.extract_strided_slice %29 {offsets = [0, 32], sizes = [8, 32], strides = [1, 1]} : vector<8x128xf32> to vector<8x32xf32>
    %cst_30 = arith.constant 5.000000e-01 : f32
    %36 = vector.broadcast %cst_30 : f32 to vector<8x32xf32>
    %37 = arith.mulf %36, %35 : vector<8x32xf32>
    %cst_31 = arith.constant 5.000000e-01 : f32
    %38 = vector.broadcast %cst_31 : f32 to vector<8x32xf32>
    %39 = arith.addf %37, %38 : vector<8x32xf32>
    %40 = vector.extract_strided_slice %29 {offsets = [0, 64], sizes = [8, 32], strides = [1, 1]} : vector<8x128xf32> to vector<8x32xf32>
    %41 = vector.extract_strided_slice %29 {offsets = [0, 96], sizes = [8, 32], strides = [1, 1]} : vector<8x128xf32> to vector<8x32xf32>
    %cst_32 = arith.constant 5.000000e-01 : f32
    %42 = vector.broadcast %cst_32 : f32 to vector<8x32xf32>
    %43 = arith.mulf %42, %41 : vector<8x32xf32>
    %cst_33 = arith.constant 5.000000e-01 : f32
    %44 = vector.broadcast %cst_33 : f32 to vector<8x32xf32>
    %45 = arith.addf %43, %44 : vector<8x32xf32>
    %46 = arith.mulf %39, %21 : vector<8x32xf32>
    %47 = arith.mulf %34, %40 : vector<8x32xf32>
    %48 = arith.addf %46, %47 : vector<8x32xf32>
    %49 = math.tanh %48 : vector<8x32xf32>
    %50 = arith.mulf %45, %49 : vector<8x32xf32>
    %51 = arith.index_cast %23 : i32 to index
    %c0_34 = arith.constant 0 : index
    %52 = vector.load %arg11[%51, %c0_34] : memref<64x32xf32, #tpu.memory_space<vmem>>, vector<8x32xf32>
    tpu.vector_store %arg11[%51, %c0_34], %50 {strides = array<i32>} : memref<64x32xf32, #tpu.memory_space<vmem>>, vector<8x32xf32>,
    %c1_i32 = arith.constant 1 : i32
    %c8_i32_35 = arith.constant 8 : i32
    %53 = arith.muli %c1_i32, %c8_i32_35 : i32
    %54 = tpu.assume_multiple %53, 8 : i32
    %55 = arith.index_cast %54 : i32 to index
    %c0_36 = arith.constant 0 : index
    %56 = vector.load %arg10[%55, %c0_36] : memref<64x128xf32, #tpu.memory_space<vmem>>, vector<8x128xf32>
    %57 = arith.truncf %50 : vector<8x32xf32> to vector<8x32xbf16>
    %cst_37 = arith.constant dense<0.000000e+00> : vector<8x128xf32>
    %58 = tpu.matmul %57, %7, %cst_37 {dimension_numbers = #tpu.dot_dimension_numbers<[1], [0], [0], [1], [0, 0, 1, 1], [], []>} : vector<8x32xbf16>, vector<32x128xbf16>, vector<8x128xf32> -> vector<8x128xf32>
    %59 = arith.addf %56, %58 : vector<8x128xf32>
    %60 = math.tanh %59 : vector<8x128xf32>
    %61 = vector.extract_strided_slice %60 {offsets = [0, 0], sizes = [8, 32], strides = [1, 1]} : vector<8x128xf32> to vector<8x32xf32>
    %cst_38 = arith.constant 5.000000e-01 : f32
    %62 = vector.broadcast %cst_38 : f32 to vector<8x32xf32>
    %63 = arith.mulf %62, %61 : vector<8x32xf32>
    %cst_39 = arith.constant 5.000000e-01 : f32
    %64 = vector.broadcast %cst_39 : f32 to vector<8x32xf32>
    %65 = arith.addf %63, %64 : vector<8x32xf32>
    %66 = vector.extract_strided_slice %60 {offsets = [0, 32], sizes = [8, 32], strides = [1, 1]} : vector<8x128xf32> to vector<8x32xf32>
    %cst_40 = arith.constant 5.000000e-01 : f32
    %67 = vector.broadcast %cst_40 : f32 to vector<8x32xf32>
    %68 = arith.mulf %67, %66 : vector<8x32xf32>
    %cst_41 = arith.constant 5.000000e-01 : f32
    %69 = vector.broadcast %cst_41 : f32 to vector<8x32xf32>
    %70 = arith.addf %68, %69 : vector<8x32xf32>
    %71 = vector.extract_strided_slice %60 {offsets = [0, 64], sizes = [8, 32], strides = [1, 1]} : vector<8x128xf32> to vector<8x32xf32>
    %72 = vector.extract_strided_slice %60 {offsets = [0, 96], sizes = [8, 32], strides = [1, 1]} : vector<8x128xf32> to vector<8x32xf32>
    %cst_42 = arith.constant 5.000000e-01 : f32
    %73 = vector.broadcast %cst_42 : f32 to vector<8x32xf32>
    %74 = arith.mulf %73, %72 : vector<8x32xf32>
    %cst_43 = arith.constant 5.000000e-01 : f32
    %75 = vector.broadcast %cst_43 : f32 to vector<8x32xf32>
    %76 = arith.addf %74, %75 : vector<8x32xf32>
    %77 = arith.mulf %70, %48 : vector<8x32xf32>
    %78 = arith.mulf %65, %71 : vector<8x32xf32>
    %79 = arith.addf %77, %78 : vector<8x32xf32>
    %80 = math.tanh %79 : vector<8x32xf32>
    %81 = arith.mulf %76, %80 : vector<8x32xf32>
    %82 = arith.index_cast %54 : i32 to index
    %c0_44 = arith.constant 0 : index
    %83 = vector.load %arg11[%82, %c0_44] : memref<64x32xf32, #tpu.memory_space<vmem>>, vector<8x32xf32>
    tpu.vector_store %arg11[%82, %c0_44], %81 {strides = array<i32>} : memref<64x32xf32, #tpu.memory_space<vmem>>, vector<8x32xf32>,
    %c2_i32 = arith.constant 2 : i32
    %c8_i32_45 = arith.constant 8 : i32
    %84 = arith.muli %c2_i32, %c8_i32_45 : i32
    %85 = tpu.assume_multiple %84, 8 : i32
    %86 = arith.index_cast %85 : i32 to index
    %c0_46 = arith.constant 0 : index
    %87 = vector.load %arg10[%86, %c0_46] : memref<64x128xf32, #tpu.memory_space<vmem>>, vector<8x128xf32>
    %88 = arith.truncf %81 : vector<8x32xf32> to vector<8x32xbf16>
    %cst_47 = arith.constant dense<0.000000e+00> : vector<8x128xf32>
    %89 = tpu.matmul %88, %7, %cst_47 {dimension_numbers = #tpu.dot_dimension_numbers<[1], [0], [0], [1], [0, 0, 1, 1], [], []>} : vector<8x32xbf16>, vector<32x128xbf16>, vector<8x128xf32> -> vector<8x128xf32>
    %90 = arith.addf %87, %89 : vector<8x128xf32>
    %91 = math.tanh %90 : vector<8x128xf32>
    %92 = vector.extract_strided_slice %91 {offsets = [0, 0], sizes = [8, 32], strides = [1, 1]} : vector<8x128xf32> to vector<8x32xf32>
    %cst_48 = arith.constant 5.000000e-01 : f32
    %93 = vector.broadcast %cst_48 : f32 to vector<8x32xf32>
    %94 = arith.mulf %93, %92 : vector<8x32xf32>
    %cst_49 = arith.constant 5.000000e-01 : f32
    %95 = vector.broadcast %cst_49 : f32 to vector<8x32xf32>
    %96 = arith.addf %94, %95 : vector<8x32xf32>
    %97 = vector.extract_strided_slice %91 {offsets = [0, 32], sizes = [8, 32], strides = [1, 1]} : vector<8x128xf32> to vector<8x32xf32>
    %cst_50 = arith.constant 5.000000e-01 : f32
    %98 = vector.broadcast %cst_50 : f32 to vector<8x32xf32>
    %99 = arith.mulf %98, %97 : vector<8x32xf32>
    %cst_51 = arith.constant 5.000000e-01 : f32
    %100 = vector.broadcast %cst_51 : f32 to vector<8x32xf32>
    %101 = arith.addf %99, %100 : vector<8x32xf32>
    %102 = vector.extract_strided_slice %91 {offsets = [0, 64], sizes = [8, 32], strides = [1, 1]} : vector<8x128xf32> to vector<8x32xf32>
    %103 = vector.extract_strided_slice %91 {offsets = [0, 96], sizes = [8, 32], strides = [1, 1]} : vector<8x128xf32> to vector<8x32xf32>
    %cst_52 = arith.constant 5.000000e-01 : f32
    %104 = vector.broadcast %cst_52 : f32 to vector<8x32xf32>
    %105 = arith.mulf %104, %103 : vector<8x32xf32>
    %cst_53 = arith.constant 5.000000e-01 : f32
    %106 = vector.broadcast %cst_53 : f32 to vector<8x32xf32>
    %107 = arith.addf %105, %106 : vector<8x32xf32>
    %108 = arith.mulf %101, %79 : vector<8x32xf32>
    %109 = arith.mulf %96, %102 : vector<8x32xf32>
    %110 = arith.addf %108, %109 : vector<8x32xf32>
    %111 = math.tanh %110 : vector<8x32xf32>
    %112 = arith.mulf %107, %111 : vector<8x32xf32>
    %113 = arith.index_cast %85 : i32 to index
    %c0_54 = arith.constant 0 : index
    %114 = vector.load %arg11[%113, %c0_54] : memref<64x32xf32, #tpu.memory_space<vmem>>, vector<8x32xf32>
    tpu.vector_store %arg11[%113, %c0_54], %112 {strides = array<i32>} : memref<64x32xf32, #tpu.memory_space<vmem>>, vector<8x32xf32>,
    %c3_i32 = arith.constant 3 : i32
    %c8_i32_55 = arith.constant 8 : i32
    %115 = arith.muli %c3_i32, %c8_i32_55 : i32
    %116 = tpu.assume_multiple %115, 8 : i32
    %117 = arith.index_cast %116 : i32 to index
    %c0_56 = arith.constant 0 : index
    %118 = vector.load %arg10[%117, %c0_56] : memref<64x128xf32, #tpu.memory_space<vmem>>, vector<8x128xf32>
    %119 = arith.truncf %112 : vector<8x32xf32> to vector<8x32xbf16>
    %cst_57 = arith.constant dense<0.000000e+00> : vector<8x128xf32>
    %120 = tpu.matmul %119, %7, %cst_57 {dimension_numbers = #tpu.dot_dimension_numbers<[1], [0], [0], [1], [0, 0, 1, 1], [], []>} : vector<8x32xbf16>, vector<32x128xbf16>, vector<8x128xf32> -> vector<8x128xf32>
    %121 = arith.addf %118, %120 : vector<8x128xf32>
    %122 = math.tanh %121 : vector<8x128xf32>
    %123 = vector.extract_strided_slice %122 {offsets = [0, 0], sizes = [8, 32], strides = [1, 1]} : vector<8x128xf32> to vector<8x32xf32>
    %cst_58 = arith.constant 5.000000e-01 : f32
    %124 = vector.broadcast %cst_58 : f32 to vector<8x32xf32>
    %125 = arith.mulf %124, %123 : vector<8x32xf32>
    %cst_59 = arith.constant 5.000000e-01 : f32
    %126 = vector.broadcast %cst_59 : f32 to vector<8x32xf32>
    %127 = arith.addf %125, %126 : vector<8x32xf32>
    %128 = vector.extract_strided_slice %122 {offsets = [0, 32], sizes = [8, 32], strides = [1, 1]} : vector<8x128xf32> to vector<8x32xf32>
    %cst_60 = arith.constant 5.000000e-01 : f32
    %129 = vector.broadcast %cst_60 : f32 to vector<8x32xf32>
    %130 = arith.mulf %129, %128 : vector<8x32xf32>
    %cst_61 = arith.constant 5.000000e-01 : f32
    %131 = vector.broadcast %cst_61 : f32 to vector<8x32xf32>
    %132 = arith.addf %130, %131 : vector<8x32xf32>
    %133 = vector.extract_strided_slice %122 {offsets = [0, 64], sizes = [8, 32], strides = [1, 1]} : vector<8x128xf32> to vector<8x32xf32>
    %134 = vector.extract_strided_slice %122 {offsets = [0, 96], sizes = [8, 32], strides = [1, 1]} : vector<8x128xf32> to vector<8x32xf32>
    %cst_62 = arith.constant 5.000000e-01 : f32
    %135 = vector.broadcast %cst_62 : f32 to vector<8x32xf32>
    %136 = arith.mulf %135, %134 : vector<8x32xf32>
    %cst_63 = arith.constant 5.000000e-01 : f32
    %137 = vector.broadcast %cst_63 : f32 to vector<8x32xf32>
    %138 = arith.addf %136, %137 : vector<8x32xf32>
    %139 = arith.mulf %132, %110 : vector<8x32xf32>
    %140 = arith.mulf %127, %133 : vector<8x32xf32>
    %141 = arith.addf %139, %140 : vector<8x32xf32>
    %142 = math.tanh %141 : vector<8x32xf32>
    %143 = arith.mulf %138, %142 : vector<8x32xf32>
    %144 = arith.index_cast %116 : i32 to index
    %c0_64 = arith.constant 0 : index
    %145 = vector.load %arg11[%144, %c0_64] : memref<64x32xf32, #tpu.memory_space<vmem>>, vector<8x32xf32>
    tpu.vector_store %arg11[%144, %c0_64], %143 {strides = array<i32>} : memref<64x32xf32, #tpu.memory_space<vmem>>, vector<8x32xf32>,
    %c4_i32 = arith.constant 4 : i32
    %c8_i32_65 = arith.constant 8 : i32
    %146 = arith.muli %c4_i32, %c8_i32_65 : i32
    %147 = tpu.assume_multiple %146, 8 : i32
    %148 = arith.index_cast %147 : i32 to index
    %c0_66 = arith.constant 0 : index
    %149 = vector.load %arg10[%148, %c0_66] : memref<64x128xf32, #tpu.memory_space<vmem>>, vector<8x128xf32>
    %150 = arith.truncf %143 : vector<8x32xf32> to vector<8x32xbf16>
    %cst_67 = arith.constant dense<0.000000e+00> : vector<8x128xf32>
    %151 = tpu.matmul %150, %7, %cst_67 {dimension_numbers = #tpu.dot_dimension_numbers<[1], [0], [0], [1], [0, 0, 1, 1], [], []>} : vector<8x32xbf16>, vector<32x128xbf16>, vector<8x128xf32> -> vector<8x128xf32>
    %152 = arith.addf %149, %151 : vector<8x128xf32>
    %153 = math.tanh %152 : vector<8x128xf32>
    %154 = vector.extract_strided_slice %153 {offsets = [0, 0], sizes = [8, 32], strides = [1, 1]} : vector<8x128xf32> to vector<8x32xf32>
    %cst_68 = arith.constant 5.000000e-01 : f32
    %155 = vector.broadcast %cst_68 : f32 to vector<8x32xf32>
    %156 = arith.mulf %155, %154 : vector<8x32xf32>
    %cst_69 = arith.constant 5.000000e-01 : f32
    %157 = vector.broadcast %cst_69 : f32 to vector<8x32xf32>
    %158 = arith.addf %156, %157 : vector<8x32xf32>
    %159 = vector.extract_strided_slice %153 {offsets = [0, 32], sizes = [8, 32], strides = [1, 1]} : vector<8x128xf32> to vector<8x32xf32>
    %cst_70 = arith.constant 5.000000e-01 : f32
    %160 = vector.broadcast %cst_70 : f32 to vector<8x32xf32>
    %161 = arith.mulf %160, %159 : vector<8x32xf32>
    %cst_71 = arith.constant 5.000000e-01 : f32
    %162 = vector.broadcast %cst_71 : f32 to vector<8x32xf32>
    %163 = arith.addf %161, %162 : vector<8x32xf32>
    %164 = vector.extract_strided_slice %153 {offsets = [0, 64], sizes = [8, 32], strides = [1, 1]} : vector<8x128xf32> to vector<8x32xf32>
    %165 = vector.extract_strided_slice %153 {offsets = [0, 96], sizes = [8, 32], strides = [1, 1]} : vector<8x128xf32> to vector<8x32xf32>
    %cst_72 = arith.constant 5.000000e-01 : f32
    %166 = vector.broadcast %cst_72 : f32 to vector<8x32xf32>
    %167 = arith.mulf %166, %165 : vector<8x32xf32>
    %cst_73 = arith.constant 5.000000e-01 : f32
    %168 = vector.broadcast %cst_73 : f32 to vector<8x32xf32>
    %169 = arith.addf %167, %168 : vector<8x32xf32>
    %170 = arith.mulf %163, %141 : vector<8x32xf32>
    %171 = arith.mulf %158, %164 : vector<8x32xf32>
    %172 = arith.addf %170, %171 : vector<8x32xf32>
    %173 = math.tanh %172 : vector<8x32xf32>
    %174 = arith.mulf %169, %173 : vector<8x32xf32>
    %175 = arith.index_cast %147 : i32 to index
    %c0_74 = arith.constant 0 : index
    %176 = vector.load %arg11[%175, %c0_74] : memref<64x32xf32, #tpu.memory_space<vmem>>, vector<8x32xf32>
    tpu.vector_store %arg11[%175, %c0_74], %174 {strides = array<i32>} : memref<64x32xf32, #tpu.memory_space<vmem>>, vector<8x32xf32>,
    %c5_i32 = arith.constant 5 : i32
    %c8_i32_75 = arith.constant 8 : i32
    %177 = arith.muli %c5_i32, %c8_i32_75 : i32
    %178 = tpu.assume_multiple %177, 8 : i32
    %179 = arith.index_cast %178 : i32 to index
    %c0_76 = arith.constant 0 : index
    %180 = vector.load %arg10[%179, %c0_76] : memref<64x128xf32, #tpu.memory_space<vmem>>, vector<8x128xf32>
    %181 = arith.truncf %174 : vector<8x32xf32> to vector<8x32xbf16>
    %cst_77 = arith.constant dense<0.000000e+00> : vector<8x128xf32>
    %182 = tpu.matmul %181, %7, %cst_77 {dimension_numbers = #tpu.dot_dimension_numbers<[1], [0], [0], [1], [0, 0, 1, 1], [], []>} : vector<8x32xbf16>, vector<32x128xbf16>, vector<8x128xf32> -> vector<8x128xf32>
    %183 = arith.addf %180, %182 : vector<8x128xf32>
    %184 = math.tanh %183 : vector<8x128xf32>
    %185 = vector.extract_strided_slice %184 {offsets = [0, 0], sizes = [8, 32], strides = [1, 1]} : vector<8x128xf32> to vector<8x32xf32>
    %cst_78 = arith.constant 5.000000e-01 : f32
    %186 = vector.broadcast %cst_78 : f32 to vector<8x32xf32>
    %187 = arith.mulf %186, %185 : vector<8x32xf32>
    %cst_79 = arith.constant 5.000000e-01 : f32
    %188 = vector.broadcast %cst_79 : f32 to vector<8x32xf32>
    %189 = arith.addf %187, %188 : vector<8x32xf32>
    %190 = vector.extract_strided_slice %184 {offsets = [0, 32], sizes = [8, 32], strides = [1, 1]} : vector<8x128xf32> to vector<8x32xf32>
    %cst_80 = arith.constant 5.000000e-01 : f32
    %191 = vector.broadcast %cst_80 : f32 to vector<8x32xf32>
    %192 = arith.mulf %191, %190 : vector<8x32xf32>
    %cst_81 = arith.constant 5.000000e-01 : f32
    %193 = vector.broadcast %cst_81 : f32 to vector<8x32xf32>
    %194 = arith.addf %192, %193 : vector<8x32xf32>
    %195 = vector.extract_strided_slice %184 {offsets = [0, 64], sizes = [8, 32], strides = [1, 1]} : vector<8x128xf32> to vector<8x32xf32>
    %196 = vector.extract_strided_slice %184 {offsets = [0, 96], sizes = [8, 32], strides = [1, 1]} : vector<8x128xf32> to vector<8x32xf32>
    %cst_82 = arith.constant 5.000000e-01 : f32
    %197 = vector.broadcast %cst_82 : f32 to vector<8x32xf32>
    %198 = arith.mulf %197, %196 : vector<8x32xf32>
    %cst_83 = arith.constant 5.000000e-01 : f32
    %199 = vector.broadcast %cst_83 : f32 to vector<8x32xf32>
    %200 = arith.addf %198, %199 : vector<8x32xf32>
    %201 = arith.mulf %194, %172 : vector<8x32xf32>
    %202 = arith.mulf %189, %195 : vector<8x32xf32>
    %203 = arith.addf %201, %202 : vector<8x32xf32>
    %204 = math.tanh %203 : vector<8x32xf32>
    %205 = arith.mulf %200, %204 : vector<8x32xf32>
    %206 = arith.index_cast %178 : i32 to index
    %c0_84 = arith.constant 0 : index
    %207 = vector.load %arg11[%206, %c0_84] : memref<64x32xf32, #tpu.memory_space<vmem>>, vector<8x32xf32>
    tpu.vector_store %arg11[%206, %c0_84], %205 {strides = array<i32>} : memref<64x32xf32, #tpu.memory_space<vmem>>, vector<8x32xf32>,
    %c6_i32 = arith.constant 6 : i32
    %c8_i32_85 = arith.constant 8 : i32
    %208 = arith.muli %c6_i32, %c8_i32_85 : i32
    %209 = tpu.assume_multiple %208, 8 : i32
    %210 = arith.index_cast %209 : i32 to index
    %c0_86 = arith.constant 0 : index
    %211 = vector.load %arg10[%210, %c0_86] : memref<64x128xf32, #tpu.memory_space<vmem>>, vector<8x128xf32>
    %212 = arith.truncf %205 : vector<8x32xf32> to vector<8x32xbf16>
    %cst_87 = arith.constant dense<0.000000e+00> : vector<8x128xf32>
    %213 = tpu.matmul %212, %7, %cst_87 {dimension_numbers = #tpu.dot_dimension_numbers<[1], [0], [0], [1], [0, 0, 1, 1], [], []>} : vector<8x32xbf16>, vector<32x128xbf16>, vector<8x128xf32> -> vector<8x128xf32>
    %214 = arith.addf %211, %213 : vector<8x128xf32>
    %215 = math.tanh %214 : vector<8x128xf32>
    %216 = vector.extract_strided_slice %215 {offsets = [0, 0], sizes = [8, 32], strides = [1, 1]} : vector<8x128xf32> to vector<8x32xf32>
    %cst_88 = arith.constant 5.000000e-01 : f32
    %217 = vector.broadcast %cst_88 : f32 to vector<8x32xf32>
    %218 = arith.mulf %217, %216 : vector<8x32xf32>
    %cst_89 = arith.constant 5.000000e-01 : f32
    %219 = vector.broadcast %cst_89 : f32 to vector<8x32xf32>
    %220 = arith.addf %218, %219 : vector<8x32xf32>
    %221 = vector.extract_strided_slice %215 {offsets = [0, 32], sizes = [8, 32], strides = [1, 1]} : vector<8x128xf32> to vector<8x32xf32>
    %cst_90 = arith.constant 5.000000e-01 : f32
    %222 = vector.broadcast %cst_90 : f32 to vector<8x32xf32>
    %223 = arith.mulf %222, %221 : vector<8x32xf32>
    %cst_91 = arith.constant 5.000000e-01 : f32
    %224 = vector.broadcast %cst_91 : f32 to vector<8x32xf32>
    %225 = arith.addf %223, %224 : vector<8x32xf32>
    %226 = vector.extract_strided_slice %215 {offsets = [0, 64], sizes = [8, 32], strides = [1, 1]} : vector<8x128xf32> to vector<8x32xf32>
    %227 = vector.extract_strided_slice %215 {offsets = [0, 96], sizes = [8, 32], strides = [1, 1]} : vector<8x128xf32> to vector<8x32xf32>
    %cst_92 = arith.constant 5.000000e-01 : f32
    %228 = vector.broadcast %cst_92 : f32 to vector<8x32xf32>
    %229 = arith.mulf %228, %227 : vector<8x32xf32>
    %cst_93 = arith.constant 5.000000e-01 : f32
    %230 = vector.broadcast %cst_93 : f32 to vector<8x32xf32>
    %231 = arith.addf %229, %230 : vector<8x32xf32>
    %232 = arith.mulf %225, %203 : vector<8x32xf32>
    %233 = arith.mulf %220, %226 : vector<8x32xf32>
    %234 = arith.addf %232, %233 : vector<8x32xf32>
    %235 = math.tanh %234 : vector<8x32xf32>
    %236 = arith.mulf %231, %235 : vector<8x32xf32>
    %237 = arith.index_cast %209 : i32 to index
    %c0_94 = arith.constant 0 : index
    %238 = vector.load %arg11[%237, %c0_94] : memref<64x32xf32, #tpu.memory_space<vmem>>, vector<8x32xf32>
    tpu.vector_store %arg11[%237, %c0_94], %236 {strides = array<i32>} : memref<64x32xf32, #tpu.memory_space<vmem>>, vector<8x32xf32>,
    %c7_i32 = arith.constant 7 : i32
    %c8_i32_95 = arith.constant 8 : i32
    %239 = arith.muli %c7_i32, %c8_i32_95 : i32
    %240 = tpu.assume_multiple %239, 8 : i32
    %241 = arith.index_cast %240 : i32 to index
    %c0_96 = arith.constant 0 : index
    %242 = vector.load %arg10[%241, %c0_96] : memref<64x128xf32, #tpu.memory_space<vmem>>, vector<8x128xf32>
    %243 = arith.truncf %236 : vector<8x32xf32> to vector<8x32xbf16>
    %cst_97 = arith.constant dense<0.000000e+00> : vector<8x128xf32>
    %244 = tpu.matmul %243, %7, %cst_97 {dimension_numbers = #tpu.dot_dimension_numbers<[1], [0], [0], [1], [0, 0, 1, 1], [], []>} : vector<8x32xbf16>, vector<32x128xbf16>, vector<8x128xf32> -> vector<8x128xf32>
    %245 = arith.addf %242, %244 : vector<8x128xf32>
    %246 = math.tanh %245 : vector<8x128xf32>
    %247 = vector.extract_strided_slice %246 {offsets = [0, 0], sizes = [8, 32], strides = [1, 1]} : vector<8x128xf32> to vector<8x32xf32>
    %cst_98 = arith.constant 5.000000e-01 : f32
    %248 = vector.broadcast %cst_98 : f32 to vector<8x32xf32>
    %249 = arith.mulf %248, %247 : vector<8x32xf32>
    %cst_99 = arith.constant 5.000000e-01 : f32
    %250 = vector.broadcast %cst_99 : f32 to vector<8x32xf32>
    %251 = arith.addf %249, %250 : vector<8x32xf32>
    %252 = vector.extract_strided_slice %246 {offsets = [0, 32], sizes = [8, 32], strides = [1, 1]} : vector<8x128xf32> to vector<8x32xf32>
    %cst_100 = arith.constant 5.000000e-01 : f32
    %253 = vector.broadcast %cst_100 : f32 to vector<8x32xf32>
    %254 = arith.mulf %253, %252 : vector<8x32xf32>
    %cst_101 = arith.constant 5.000000e-01 : f32
    %255 = vector.broadcast %cst_101 : f32 to vector<8x32xf32>
    %256 = arith.addf %254, %255 : vector<8x32xf32>
    %257 = vector.extract_strided_slice %246 {offsets = [0, 64], sizes = [8, 32], strides = [1, 1]} : vector<8x128xf32> to vector<8x32xf32>
    %258 = vector.extract_strided_slice %246 {offsets = [0, 96], sizes = [8, 32], strides = [1, 1]} : vector<8x128xf32> to vector<8x32xf32>
    %cst_102 = arith.constant 5.000000e-01 : f32
    %259 = vector.broadcast %cst_102 : f32 to vector<8x32xf32>
    %260 = arith.mulf %259, %258 : vector<8x32xf32>
    %cst_103 = arith.constant 5.000000e-01 : f32
    %261 = vector.broadcast %cst_103 : f32 to vector<8x32xf32>
    %262 = arith.addf %260, %261 : vector<8x32xf32>
    %263 = arith.mulf %256, %234 : vector<8x32xf32>
    %264 = arith.mulf %251, %257 : vector<8x32xf32>
    %265 = arith.addf %263, %264 : vector<8x32xf32>
    %266 = math.tanh %265 : vector<8x32xf32>
    %267 = arith.mulf %262, %266 : vector<8x32xf32>
    %268 = arith.index_cast %240 : i32 to index
    %c0_104 = arith.constant 0 : index
    %269 = vector.load %arg11[%268, %c0_104] : memref<64x32xf32, #tpu.memory_space<vmem>>, vector<8x32xf32>
    tpu.vector_store %arg11[%268, %c0_104], %267 {strides = array<i32>} : memref<64x32xf32, #tpu.memory_space<vmem>>, vector<8x32xf32>,
    %c8_i32_105 = arith.constant 8 : i32
    %c0_106 = arith.constant 0 : index
    %c0_107 = arith.constant 0 : index
    %c0_108 = arith.constant 0 : index
    %270 = vector.load %arg12[%c0_106, %c0_107, %c0_108] : memref<2x8x32xf32, #tpu.memory_space<vmem>>, vector<1x8x32xf32>
    %271 = vector.shape_cast %270 : vector<1x8x32xf32> to vector<8x32xf32>
    %272 = vector.shape_cast %267 : vector<8x32xf32> to vector<1x8x32xf32>
    tpu.vector_store %arg12[%c0_106, %c0_107, %c0_108], %272 {strides = array<i32>} : memref<2x8x32xf32, #tpu.memory_space<vmem>>, vector<1x8x32xf32>,
    %c0_109 = arith.constant 0 : index
    %c0_110 = arith.constant 0 : index
    %c0_111 = arith.constant 0 : index
    %273 = vector.load %arg13[%c0_109, %c0_110, %c0_111] : memref<2x8x32xf32, #tpu.memory_space<vmem>>, vector<1x8x32xf32>
    %274 = vector.shape_cast %273 : vector<1x8x32xf32> to vector<8x32xf32>
    %275 = vector.shape_cast %265 : vector<8x32xf32> to vector<1x8x32xf32>
    tpu.vector_store %arg13[%c0_109, %c0_110, %c0_111], %275 {strides = array<i32>} : memref<2x8x32xf32, #tpu.memory_space<vmem>>, vector<1x8x32xf32>,
    %c0_112 = arith.constant 0 : index
    %c0_113 = arith.constant 0 : index
    %276 = vector.load %arg11[%c0_112, %c0_113] : memref<64x32xf32, #tpu.memory_space<vmem>>, vector<64x32xf32>
    %277 = arith.truncf %276 : vector<64x32xf32> to vector<64x32xbf16>
    %cst_114 = arith.constant dense<0.000000e+00> : vector<64x128xf32>
    %278 = tpu.matmul %277, %11, %cst_114 {dimension_numbers = #tpu.dot_dimension_numbers<[1], [0], [0], [1], [0, 0, 1, 1], [], []>} : vector<64x32xbf16>, vector<32x128xbf16>, vector<64x128xf32> -> vector<64x128xf32>
    %279 = vector.broadcast %13 : vector<1x128xf32> to vector<64x128xf32>
    %280 = arith.addf %278, %279 : vector<64x128xf32>
    %c1 = arith.constant 1 : index
    %c0_115 = arith.constant 0 : index
    %c0_116 = arith.constant 0 : index
    %281 = vector.load %arg3[%c1, %c0_115, %c0_116] : memref<2x3x128xbf16, #tpu.memory_space<vmem>>, vector<1x3x128xbf16>
    %282 = vector.shape_cast %281 : vector<1x3x128xbf16> to vector<3x128xbf16>
    %c1_117 = arith.constant 1 : index
    %c0_118 = arith.constant 0 : index
    %c0_119 = arith.constant 0 : index
    %283 = vector.load %arg5[%c1_117, %c0_118, %c0_119] : memref<2x32x128xbf16, #tpu.memory_space<vmem>>, vector<1x32x128xbf16>
    %284 = vector.shape_cast %283 : vector<1x32x128xbf16> to vector<32x128xbf16>
    %c1_120 = arith.constant 1 : index
    %c0_121 = arith.constant 0 : index
    %c0_122 = arith.constant 0 : index
    %285 = vector.load %arg6[%c1_120, %c0_121, %c0_122] : memref<2x1x128xf32, #tpu.memory_space<vmem>>, vector<1x1x128xf32>
    %286 = vector.shape_cast %285 : vector<1x1x128xf32> to vector<1x128xf32>
    %c1_123 = arith.constant 1 : index
    %c0_124 = arith.constant 0 : index
    %c0_125 = arith.constant 0 : index
    %287 = vector.load %arg7[%c1_123, %c0_124, %c0_125] : memref<2x32x128xbf16, #tpu.memory_space<vmem>>, vector<1x32x128xbf16>
    %288 = vector.shape_cast %287 : vector<1x32x128xbf16> to vector<32x128xbf16>
    %c1_126 = arith.constant 1 : index
    %c0_127 = arith.constant 0 : index
    %c0_128 = arith.constant 0 : index
    %289 = vector.load %arg8[%c1_126, %c0_127, %c0_128] : memref<2x1x128xf32, #tpu.memory_space<vmem>>, vector<1x1x128xf32>
    %290 = vector.shape_cast %289 : vector<1x1x128xf32> to vector<1x128xf32>
    %cst_129 = arith.constant dense<0.000000e+00> : vector<64x128xf32>
    %291 = tpu.matmul %3, %282, %cst_129 {dimension_numbers = #tpu.dot_dimension_numbers<[1], [0], [0], [1], [0, 0, 1, 1], [], []>} : vector<64x3xbf16>, vector<3x128xbf16>, vector<64x128xf32> -> vector<64x128xf32>
    %292 = vector.broadcast %286 : vector<1x128xf32> to vector<64x128xf32>
    %293 = arith.addf %291, %292 : vector<64x128xf32>
    %c0_130 = arith.constant 0 : index
    %c0_131 = arith.constant 0 : index
    %294 = vector.load %arg11[%c0_130, %c0_131] : memref<64x32xf32, #tpu.memory_space<vmem>>, vector<64x32xf32>
    %295 = arith.truncf %294 : vector<64x32xf32> to vector<64x32xbf16>
    %c1_132 = arith.constant 1 : index
    %c0_133 = arith.constant 0 : index
    %c0_134 = arith.constant 0 : index
    %296 = vector.load %arg4[%c1_132, %c0_133, %c0_134] : memref<2x32x128xbf16, #tpu.memory_space<vmem>>, vector<1x32x128xbf16>
    %297 = vector.shape_cast %296 : vector<1x32x128xbf16> to vector<32x128xbf16>
    %cst_135 = arith.constant dense<0.000000e+00> : vector<64x128xf32>
    %298 = tpu.matmul %295, %297, %cst_135 {dimension_numbers = #tpu.dot_dimension_numbers<[1], [0], [0], [1], [0, 0, 1, 1], [], []>} : vector<64x32xbf16>, vector<32x128xbf16>, vector<64x128xf32> -> vector<64x128xf32>
    %299 = arith.addf %293, %298 : vector<64x128xf32>
    %c0_136 = arith.constant 0 : index
    %c0_137 = arith.constant 0 : index
    %300 = vector.load %arg10[%c0_136, %c0_137] : memref<64x128xf32, #tpu.memory_space<vmem>>, vector<64x128xf32>
    tpu.vector_store %arg10[%c0_136, %c0_137], %299 {strides = array<i32>} : memref<64x128xf32, #tpu.memory_space<vmem>>, vector<64x128xf32>,
    %c1_138 = arith.constant 1 : index
    %c0_139 = arith.constant 0 : index
    %c0_140 = arith.constant 0 : index
    %301 = vector.load %arg12[%c1_138, %c0_139, %c0_140] : memref<2x8x32xf32, #tpu.memory_space<vmem>>, vector<1x8x32xf32>
    %302 = vector.shape_cast %301 : vector<1x8x32xf32> to vector<8x32xf32>
    %c1_141 = arith.constant 1 : index
    %c0_142 = arith.constant 0 : index
    %c0_143 = arith.constant 0 : index
    %303 = vector.load %arg13[%c1_141, %c0_142, %c0_143] : memref<2x8x32xf32, #tpu.memory_space<vmem>>, vector<1x8x32xf32>
    %304 = vector.shape_cast %303 : vector<1x8x32xf32> to vector<8x32xf32>
    %c0_i32_144 = arith.constant 0 : i32
    %c8_i32_145 = arith.constant 8 : i32
    %305 = arith.muli %c0_i32_144, %c8_i32_145 : i32
    %306 = tpu.assume_multiple %305, 8 : i32
    %307 = arith.index_cast %306 : i32 to index
    %c0_146 = arith.constant 0 : index
    %308 = vector.load %arg10[%307, %c0_146] : memref<64x128xf32, #tpu.memory_space<vmem>>, vector<8x128xf32>
    %309 = arith.truncf %302 : vector<8x32xf32> to vector<8x32xbf16>
    %cst_147 = arith.constant dense<0.000000e+00> : vector<8x128xf32>
    %310 = tpu.matmul %309, %284, %cst_147 {dimension_numbers = #tpu.dot_dimension_numbers<[1], [0], [0], [1], [0, 0, 1, 1], [], []>} : vector<8x32xbf16>, vector<32x128xbf16>, vector<8x128xf32> -> vector<8x128xf32>
    %311 = arith.addf %308, %310 : vector<8x128xf32>
    %312 = math.tanh %311 : vector<8x128xf32>
    %313 = vector.extract_strided_slice %312 {offsets = [0, 0], sizes = [8, 32], strides = [1, 1]} : vector<8x128xf32> to vector<8x32xf32>
    %cst_148 = arith.constant 5.000000e-01 : f32
    %314 = vector.broadcast %cst_148 : f32 to vector<8x32xf32>
    %315 = arith.mulf %314, %313 : vector<8x32xf32>
    %cst_149 = arith.constant 5.000000e-01 : f32
    %316 = vector.broadcast %cst_149 : f32 to vector<8x32xf32>
    %317 = arith.addf %315, %316 : vector<8x32xf32>
    %318 = vector.extract_strided_slice %312 {offsets = [0, 32], sizes = [8, 32], strides = [1, 1]} : vector<8x128xf32> to vector<8x32xf32>
    %cst_150 = arith.constant 5.000000e-01 : f32
    %319 = vector.broadcast %cst_150 : f32 to vector<8x32xf32>
    %320 = arith.mulf %319, %318 : vector<8x32xf32>
    %cst_151 = arith.constant 5.000000e-01 : f32
    %321 = vector.broadcast %cst_151 : f32 to vector<8x32xf32>
    %322 = arith.addf %320, %321 : vector<8x32xf32>
    %323 = vector.extract_strided_slice %312 {offsets = [0, 64], sizes = [8, 32], strides = [1, 1]} : vector<8x128xf32> to vector<8x32xf32>
    %324 = vector.extract_strided_slice %312 {offsets = [0, 96], sizes = [8, 32], strides = [1, 1]} : vector<8x128xf32> to vector<8x32xf32>
    %cst_152 = arith.constant 5.000000e-01 : f32
    %325 = vector.broadcast %cst_152 : f32 to vector<8x32xf32>
    %326 = arith.mulf %325, %324 : vector<8x32xf32>
    %cst_153 = arith.constant 5.000000e-01 : f32
    %327 = vector.broadcast %cst_153 : f32 to vector<8x32xf32>
    %328 = arith.addf %326, %327 : vector<8x32xf32>
    %329 = arith.mulf %322, %304 : vector<8x32xf32>
    %330 = arith.mulf %317, %323 : vector<8x32xf32>
    %331 = arith.addf %329, %330 : vector<8x32xf32>
    %332 = math.tanh %331 : vector<8x32xf32>
    %333 = arith.mulf %328, %332 : vector<8x32xf32>
    %334 = arith.index_cast %306 : i32 to index
    %c0_154 = arith.constant 0 : index
    %335 = vector.load %arg11[%334, %c0_154] : memref<64x32xf32, #tpu.memory_space<vmem>>, vector<8x32xf32>
    tpu.vector_store %arg11[%334, %c0_154], %333 {strides = array<i32>} : memref<64x32xf32, #tpu.memory_space<vmem>>, vector<8x32xf32>,
    %c1_i32_155 = arith.constant 1 : i32
    %c8_i32_156 = arith.constant 8 : i32
    %336 = arith.muli %c1_i32_155, %c8_i32_156 : i32
    %337 = tpu.assume_multiple %336, 8 : i32
    %338 = arith.index_cast %337 : i32 to index
    %c0_157 = arith.constant 0 : index
    %339 = vector.load %arg10[%338, %c0_157] : memref<64x128xf32, #tpu.memory_space<vmem>>, vector<8x128xf32>
    %340 = arith.truncf %333 : vector<8x32xf32> to vector<8x32xbf16>
    %cst_158 = arith.constant dense<0.000000e+00> : vector<8x128xf32>
    %341 = tpu.matmul %340, %284, %cst_158 {dimension_numbers = #tpu.dot_dimension_numbers<[1], [0], [0], [1], [0, 0, 1, 1], [], []>} : vector<8x32xbf16>, vector<32x128xbf16>, vector<8x128xf32> -> vector<8x128xf32>
    %342 = arith.addf %339, %341 : vector<8x128xf32>
    %343 = math.tanh %342 : vector<8x128xf32>
    %344 = vector.extract_strided_slice %343 {offsets = [0, 0], sizes = [8, 32], strides = [1, 1]} : vector<8x128xf32> to vector<8x32xf32>
    %cst_159 = arith.constant 5.000000e-01 : f32
    %345 = vector.broadcast %cst_159 : f32 to vector<8x32xf32>
    %346 = arith.mulf %345, %344 : vector<8x32xf32>
    %cst_160 = arith.constant 5.000000e-01 : f32
    %347 = vector.broadcast %cst_160 : f32 to vector<8x32xf32>
    %348 = arith.addf %346, %347 : vector<8x32xf32>
    %349 = vector.extract_strided_slice %343 {offsets = [0, 32], sizes = [8, 32], strides = [1, 1]} : vector<8x128xf32> to vector<8x32xf32>
    %cst_161 = arith.constant 5.000000e-01 : f32
    %350 = vector.broadcast %cst_161 : f32 to vector<8x32xf32>
    %351 = arith.mulf %350, %349 : vector<8x32xf32>
    %cst_162 = arith.constant 5.000000e-01 : f32
    %352 = vector.broadcast %cst_162 : f32 to vector<8x32xf32>
    %353 = arith.addf %351, %352 : vector<8x32xf32>
    %354 = vector.extract_strided_slice %343 {offsets = [0, 64], sizes = [8, 32], strides = [1, 1]} : vector<8x128xf32> to vector<8x32xf32>
    %355 = vector.extract_strided_slice %343 {offsets = [0, 96], sizes = [8, 32], strides = [1, 1]} : vector<8x128xf32> to vector<8x32xf32>
    %cst_163 = arith.constant 5.000000e-01 : f32
    %356 = vector.broadcast %cst_163 : f32 to vector<8x32xf32>
    %357 = arith.mulf %356, %355 : vector<8x32xf32>
    %cst_164 = arith.constant 5.000000e-01 : f32
    %358 = vector.broadcast %cst_164 : f32 to vector<8x32xf32>
    %359 = arith.addf %357, %358 : vector<8x32xf32>
    %360 = arith.mulf %353, %331 : vector<8x32xf32>
    %361 = arith.mulf %348, %354 : vector<8x32xf32>
    %362 = arith.addf %360, %361 : vector<8x32xf32>
    %363 = math.tanh %362 : vector<8x32xf32>
    %364 = arith.mulf %359, %363 : vector<8x32xf32>
    %365 = arith.index_cast %337 : i32 to index
    %c0_165 = arith.constant 0 : index
    %366 = vector.load %arg11[%365, %c0_165] : memref<64x32xf32, #tpu.memory_space<vmem>>, vector<8x32xf32>
    tpu.vector_store %arg11[%365, %c0_165], %364 {strides = array<i32>} : memref<64x32xf32, #tpu.memory_space<vmem>>, vector<8x32xf32>,
    %c2_i32_166 = arith.constant 2 : i32
    %c8_i32_167 = arith.constant 8 : i32
    %367 = arith.muli %c2_i32_166, %c8_i32_167 : i32
    %368 = tpu.assume_multiple %367, 8 : i32
    %369 = arith.index_cast %368 : i32 to index
    %c0_168 = arith.constant 0 : index
    %370 = vector.load %arg10[%369, %c0_168] : memref<64x128xf32, #tpu.memory_space<vmem>>, vector<8x128xf32>
    %371 = arith.truncf %364 : vector<8x32xf32> to vector<8x32xbf16>
    %cst_169 = arith.constant dense<0.000000e+00> : vector<8x128xf32>
    %372 = tpu.matmul %371, %284, %cst_169 {dimension_numbers = #tpu.dot_dimension_numbers<[1], [0], [0], [1], [0, 0, 1, 1], [], []>} : vector<8x32xbf16>, vector<32x128xbf16>, vector<8x128xf32> -> vector<8x128xf32>
    %373 = arith.addf %370, %372 : vector<8x128xf32>
    %374 = math.tanh %373 : vector<8x128xf32>
    %375 = vector.extract_strided_slice %374 {offsets = [0, 0], sizes = [8, 32], strides = [1, 1]} : vector<8x128xf32> to vector<8x32xf32>
    %cst_170 = arith.constant 5.000000e-01 : f32
    %376 = vector.broadcast %cst_170 : f32 to vector<8x32xf32>
    %377 = arith.mulf %376, %375 : vector<8x32xf32>
    %cst_171 = arith.constant 5.000000e-01 : f32
    %378 = vector.broadcast %cst_171 : f32 to vector<8x32xf32>
    %379 = arith.addf %377, %378 : vector<8x32xf32>
    %380 = vector.extract_strided_slice %374 {offsets = [0, 32], sizes = [8, 32], strides = [1, 1]} : vector<8x128xf32> to vector<8x32xf32>
    %cst_172 = arith.constant 5.000000e-01 : f32
    %381 = vector.broadcast %cst_172 : f32 to vector<8x32xf32>
    %382 = arith.mulf %381, %380 : vector<8x32xf32>
    %cst_173 = arith.constant 5.000000e-01 : f32
    %383 = vector.broadcast %cst_173 : f32 to vector<8x32xf32>
    %384 = arith.addf %382, %383 : vector<8x32xf32>
    %385 = vector.extract_strided_slice %374 {offsets = [0, 64], sizes = [8, 32], strides = [1, 1]} : vector<8x128xf32> to vector<8x32xf32>
    %386 = vector.extract_strided_slice %374 {offsets = [0, 96], sizes = [8, 32], strides = [1, 1]} : vector<8x128xf32> to vector<8x32xf32>
    %cst_174 = arith.constant 5.000000e-01 : f32
    %387 = vector.broadcast %cst_174 : f32 to vector<8x32xf32>
    %388 = arith.mulf %387, %386 : vector<8x32xf32>
    %cst_175 = arith.constant 5.000000e-01 : f32
    %389 = vector.broadcast %cst_175 : f32 to vector<8x32xf32>
    %390 = arith.addf %388, %389 : vector<8x32xf32>
    %391 = arith.mulf %384, %362 : vector<8x32xf32>
    %392 = arith.mulf %379, %385 : vector<8x32xf32>
    %393 = arith.addf %391, %392 : vector<8x32xf32>
    %394 = math.tanh %393 : vector<8x32xf32>
    %395 = arith.mulf %390, %394 : vector<8x32xf32>
    %396 = arith.index_cast %368 : i32 to index
    %c0_176 = arith.constant 0 : index
    %397 = vector.load %arg11[%396, %c0_176] : memref<64x32xf32, #tpu.memory_space<vmem>>, vector<8x32xf32>
    tpu.vector_store %arg11[%396, %c0_176], %395 {strides = array<i32>} : memref<64x32xf32, #tpu.memory_space<vmem>>, vector<8x32xf32>,
    %c3_i32_177 = arith.constant 3 : i32
    %c8_i32_178 = arith.constant 8 : i32
    %398 = arith.muli %c3_i32_177, %c8_i32_178 : i32
    %399 = tpu.assume_multiple %398, 8 : i32
    %400 = arith.index_cast %399 : i32 to index
    %c0_179 = arith.constant 0 : index
    %401 = vector.load %arg10[%400, %c0_179] : memref<64x128xf32, #tpu.memory_space<vmem>>, vector<8x128xf32>
    %402 = arith.truncf %395 : vector<8x32xf32> to vector<8x32xbf16>
    %cst_180 = arith.constant dense<0.000000e+00> : vector<8x128xf32>
    %403 = tpu.matmul %402, %284, %cst_180 {dimension_numbers = #tpu.dot_dimension_numbers<[1], [0], [0], [1], [0, 0, 1, 1], [], []>} : vector<8x32xbf16>, vector<32x128xbf16>, vector<8x128xf32> -> vector<8x128xf32>
    %404 = arith.addf %401, %403 : vector<8x128xf32>
    %405 = math.tanh %404 : vector<8x128xf32>
    %406 = vector.extract_strided_slice %405 {offsets = [0, 0], sizes = [8, 32], strides = [1, 1]} : vector<8x128xf32> to vector<8x32xf32>
    %cst_181 = arith.constant 5.000000e-01 : f32
    %407 = vector.broadcast %cst_181 : f32 to vector<8x32xf32>
    %408 = arith.mulf %407, %406 : vector<8x32xf32>
    %cst_182 = arith.constant 5.000000e-01 : f32
    %409 = vector.broadcast %cst_182 : f32 to vector<8x32xf32>
    %410 = arith.addf %408, %409 : vector<8x32xf32>
    %411 = vector.extract_strided_slice %405 {offsets = [0, 32], sizes = [8, 32], strides = [1, 1]} : vector<8x128xf32> to vector<8x32xf32>
    %cst_183 = arith.constant 5.000000e-01 : f32
    %412 = vector.broadcast %cst_183 : f32 to vector<8x32xf32>
    %413 = arith.mulf %412, %411 : vector<8x32xf32>
    %cst_184 = arith.constant 5.000000e-01 : f32
    %414 = vector.broadcast %cst_184 : f32 to vector<8x32xf32>
    %415 = arith.addf %413, %414 : vector<8x32xf32>
    %416 = vector.extract_strided_slice %405 {offsets = [0, 64], sizes = [8, 32], strides = [1, 1]} : vector<8x128xf32> to vector<8x32xf32>
    %417 = vector.extract_strided_slice %405 {offsets = [0, 96], sizes = [8, 32], strides = [1, 1]} : vector<8x128xf32> to vector<8x32xf32>
    %cst_185 = arith.constant 5.000000e-01 : f32
    %418 = vector.broadcast %cst_185 : f32 to vector<8x32xf32>
    %419 = arith.mulf %418, %417 : vector<8x32xf32>
    %cst_186 = arith.constant 5.000000e-01 : f32
    %420 = vector.broadcast %cst_186 : f32 to vector<8x32xf32>
    %421 = arith.addf %419, %420 : vector<8x32xf32>
    %422 = arith.mulf %415, %393 : vector<8x32xf32>
    %423 = arith.mulf %410, %416 : vector<8x32xf32>
    %424 = arith.addf %422, %423 : vector<8x32xf32>
    %425 = math.tanh %424 : vector<8x32xf32>
    %426 = arith.mulf %421, %425 : vector<8x32xf32>
    %427 = arith.index_cast %399 : i32 to index
    %c0_187 = arith.constant 0 : index
    %428 = vector.load %arg11[%427, %c0_187] : memref<64x32xf32, #tpu.memory_space<vmem>>, vector<8x32xf32>
    tpu.vector_store %arg11[%427, %c0_187], %426 {strides = array<i32>} : memref<64x32xf32, #tpu.memory_space<vmem>>, vector<8x32xf32>,
    %c4_i32_188 = arith.constant 4 : i32
    %c8_i32_189 = arith.constant 8 : i32
    %429 = arith.muli %c4_i32_188, %c8_i32_189 : i32
    %430 = tpu.assume_multiple %429, 8 : i32
    %431 = arith.index_cast %430 : i32 to index
    %c0_190 = arith.constant 0 : index
    %432 = vector.load %arg10[%431, %c0_190] : memref<64x128xf32, #tpu.memory_space<vmem>>, vector<8x128xf32>
    %433 = arith.truncf %426 : vector<8x32xf32> to vector<8x32xbf16>
    %cst_191 = arith.constant dense<0.000000e+00> : vector<8x128xf32>
    %434 = tpu.matmul %433, %284, %cst_191 {dimension_numbers = #tpu.dot_dimension_numbers<[1], [0], [0], [1], [0, 0, 1, 1], [], []>} : vector<8x32xbf16>, vector<32x128xbf16>, vector<8x128xf32> -> vector<8x128xf32>
    %435 = arith.addf %432, %434 : vector<8x128xf32>
    %436 = math.tanh %435 : vector<8x128xf32>
    %437 = vector.extract_strided_slice %436 {offsets = [0, 0], sizes = [8, 32], strides = [1, 1]} : vector<8x128xf32> to vector<8x32xf32>
    %cst_192 = arith.constant 5.000000e-01 : f32
    %438 = vector.broadcast %cst_192 : f32 to vector<8x32xf32>
    %439 = arith.mulf %438, %437 : vector<8x32xf32>
    %cst_193 = arith.constant 5.000000e-01 : f32
    %440 = vector.broadcast %cst_193 : f32 to vector<8x32xf32>
    %441 = arith.addf %439, %440 : vector<8x32xf32>
    %442 = vector.extract_strided_slice %436 {offsets = [0, 32], sizes = [8, 32], strides = [1, 1]} : vector<8x128xf32> to vector<8x32xf32>
    %cst_194 = arith.constant 5.000000e-01 : f32
    %443 = vector.broadcast %cst_194 : f32 to vector<8x32xf32>
    %444 = arith.mulf %443, %442 : vector<8x32xf32>
    %cst_195 = arith.constant 5.000000e-01 : f32
    %445 = vector.broadcast %cst_195 : f32 to vector<8x32xf32>
    %446 = arith.addf %444, %445 : vector<8x32xf32>
    %447 = vector.extract_strided_slice %436 {offsets = [0, 64], sizes = [8, 32], strides = [1, 1]} : vector<8x128xf32> to vector<8x32xf32>
    %448 = vector.extract_strided_slice %436 {offsets = [0, 96], sizes = [8, 32], strides = [1, 1]} : vector<8x128xf32> to vector<8x32xf32>
    %cst_196 = arith.constant 5.000000e-01 : f32
    %449 = vector.broadcast %cst_196 : f32 to vector<8x32xf32>
    %450 = arith.mulf %449, %448 : vector<8x32xf32>
    %cst_197 = arith.constant 5.000000e-01 : f32
    %451 = vector.broadcast %cst_197 : f32 to vector<8x32xf32>
    %452 = arith.addf %450, %451 : vector<8x32xf32>
    %453 = arith.mulf %446, %424 : vector<8x32xf32>
    %454 = arith.mulf %441, %447 : vector<8x32xf32>
    %455 = arith.addf %453, %454 : vector<8x32xf32>
    %456 = math.tanh %455 : vector<8x32xf32>
    %457 = arith.mulf %452, %456 : vector<8x32xf32>
    %458 = arith.index_cast %430 : i32 to index
    %c0_198 = arith.constant 0 : index
    %459 = vector.load %arg11[%458, %c0_198] : memref<64x32xf32, #tpu.memory_space<vmem>>, vector<8x32xf32>
    tpu.vector_store %arg11[%458, %c0_198], %457 {strides = array<i32>} : memref<64x32xf32, #tpu.memory_space<vmem>>, vector<8x32xf32>,
    %c5_i32_199 = arith.constant 5 : i32
    %c8_i32_200 = arith.constant 8 : i32
    %460 = arith.muli %c5_i32_199, %c8_i32_200 : i32
    %461 = tpu.assume_multiple %460, 8 : i32
    %462 = arith.index_cast %461 : i32 to index
    %c0_201 = arith.constant 0 : index
    %463 = vector.load %arg10[%462, %c0_201] : memref<64x128xf32, #tpu.memory_space<vmem>>, vector<8x128xf32>
    %464 = arith.truncf %457 : vector<8x32xf32> to vector<8x32xbf16>
    %cst_202 = arith.constant dense<0.000000e+00> : vector<8x128xf32>
    %465 = tpu.matmul %464, %284, %cst_202 {dimension_numbers = #tpu.dot_dimension_numbers<[1], [0], [0], [1], [0, 0, 1, 1], [], []>} : vector<8x32xbf16>, vector<32x128xbf16>, vector<8x128xf32> -> vector<8x128xf32>
    %466 = arith.addf %463, %465 : vector<8x128xf32>
    %467 = math.tanh %466 : vector<8x128xf32>
    %468 = vector.extract_strided_slice %467 {offsets = [0, 0], sizes = [8, 32], strides = [1, 1]} : vector<8x128xf32> to vector<8x32xf32>
    %cst_203 = arith.constant 5.000000e-01 : f32
    %469 = vector.broadcast %cst_203 : f32 to vector<8x32xf32>
    %470 = arith.mulf %469, %468 : vector<8x32xf32>
    %cst_204 = arith.constant 5.000000e-01 : f32
    %471 = vector.broadcast %cst_204 : f32 to vector<8x32xf32>
    %472 = arith.addf %470, %471 : vector<8x32xf32>
    %473 = vector.extract_strided_slice %467 {offsets = [0, 32], sizes = [8, 32], strides = [1, 1]} : vector<8x128xf32> to vector<8x32xf32>
    %cst_205 = arith.constant 5.000000e-01 : f32
    %474 = vector.broadcast %cst_205 : f32 to vector<8x32xf32>
    %475 = arith.mulf %474, %473 : vector<8x32xf32>
    %cst_206 = arith.constant 5.000000e-01 : f32
    %476 = vector.broadcast %cst_206 : f32 to vector<8x32xf32>
    %477 = arith.addf %475, %476 : vector<8x32xf32>
    %478 = vector.extract_strided_slice %467 {offsets = [0, 64], sizes = [8, 32], strides = [1, 1]} : vector<8x128xf32> to vector<8x32xf32>
    %479 = vector.extract_strided_slice %467 {offsets = [0, 96], sizes = [8, 32], strides = [1, 1]} : vector<8x128xf32> to vector<8x32xf32>
    %cst_207 = arith.constant 5.000000e-01 : f32
    %480 = vector.broadcast %cst_207 : f32 to vector<8x32xf32>
    %481 = arith.mulf %480, %479 : vector<8x32xf32>
    %cst_208 = arith.constant 5.000000e-01 : f32
    %482 = vector.broadcast %cst_208 : f32 to vector<8x32xf32>
    %483 = arith.addf %481, %482 : vector<8x32xf32>
    %484 = arith.mulf %477, %455 : vector<8x32xf32>
    %485 = arith.mulf %472, %478 : vector<8x32xf32>
    %486 = arith.addf %484, %485 : vector<8x32xf32>
    %487 = math.tanh %486 : vector<8x32xf32>
    %488 = arith.mulf %483, %487 : vector<8x32xf32>
    %489 = arith.index_cast %461 : i32 to index
    %c0_209 = arith.constant 0 : index
    %490 = vector.load %arg11[%489, %c0_209] : memref<64x32xf32, #tpu.memory_space<vmem>>, vector<8x32xf32>
    tpu.vector_store %arg11[%489, %c0_209], %488 {strides = array<i32>} : memref<64x32xf32, #tpu.memory_space<vmem>>, vector<8x32xf32>,
    %c6_i32_210 = arith.constant 6 : i32
    %c8_i32_211 = arith.constant 8 : i32
    %491 = arith.muli %c6_i32_210, %c8_i32_211 : i32
    %492 = tpu.assume_multiple %491, 8 : i32
    %493 = arith.index_cast %492 : i32 to index
    %c0_212 = arith.constant 0 : index
    %494 = vector.load %arg10[%493, %c0_212] : memref<64x128xf32, #tpu.memory_space<vmem>>, vector<8x128xf32>
    %495 = arith.truncf %488 : vector<8x32xf32> to vector<8x32xbf16>
    %cst_213 = arith.constant dense<0.000000e+00> : vector<8x128xf32>
    %496 = tpu.matmul %495, %284, %cst_213 {dimension_numbers = #tpu.dot_dimension_numbers<[1], [0], [0], [1], [0, 0, 1, 1], [], []>} : vector<8x32xbf16>, vector<32x128xbf16>, vector<8x128xf32> -> vector<8x128xf32>
    %497 = arith.addf %494, %496 : vector<8x128xf32>
    %498 = math.tanh %497 : vector<8x128xf32>
    %499 = vector.extract_strided_slice %498 {offsets = [0, 0], sizes = [8, 32], strides = [1, 1]} : vector<8x128xf32> to vector<8x32xf32>
    %cst_214 = arith.constant 5.000000e-01 : f32
    %500 = vector.broadcast %cst_214 : f32 to vector<8x32xf32>
    %501 = arith.mulf %500, %499 : vector<8x32xf32>
    %cst_215 = arith.constant 5.000000e-01 : f32
    %502 = vector.broadcast %cst_215 : f32 to vector<8x32xf32>
    %503 = arith.addf %501, %502 : vector<8x32xf32>
    %504 = vector.extract_strided_slice %498 {offsets = [0, 32], sizes = [8, 32], strides = [1, 1]} : vector<8x128xf32> to vector<8x32xf32>
    %cst_216 = arith.constant 5.000000e-01 : f32
    %505 = vector.broadcast %cst_216 : f32 to vector<8x32xf32>
    %506 = arith.mulf %505, %504 : vector<8x32xf32>
    %cst_217 = arith.constant 5.000000e-01 : f32
    %507 = vector.broadcast %cst_217 : f32 to vector<8x32xf32>
    %508 = arith.addf %506, %507 : vector<8x32xf32>
    %509 = vector.extract_strided_slice %498 {offsets = [0, 64], sizes = [8, 32], strides = [1, 1]} : vector<8x128xf32> to vector<8x32xf32>
    %510 = vector.extract_strided_slice %498 {offsets = [0, 96], sizes = [8, 32], strides = [1, 1]} : vector<8x128xf32> to vector<8x32xf32>
    %cst_218 = arith.constant 5.000000e-01 : f32
    %511 = vector.broadcast %cst_218 : f32 to vector<8x32xf32>
    %512 = arith.mulf %511, %510 : vector<8x32xf32>
    %cst_219 = arith.constant 5.000000e-01 : f32
    %513 = vector.broadcast %cst_219 : f32 to vector<8x32xf32>
    %514 = arith.addf %512, %513 : vector<8x32xf32>
    %515 = arith.mulf %508, %486 : vector<8x32xf32>
    %516 = arith.mulf %503, %509 : vector<8x32xf32>
    %517 = arith.addf %515, %516 : vector<8x32xf32>
    %518 = math.tanh %517 : vector<8x32xf32>
    %519 = arith.mulf %514, %518 : vector<8x32xf32>
    %520 = arith.index_cast %492 : i32 to index
    %c0_220 = arith.constant 0 : index
    %521 = vector.load %arg11[%520, %c0_220] : memref<64x32xf32, #tpu.memory_space<vmem>>, vector<8x32xf32>
    tpu.vector_store %arg11[%520, %c0_220], %519 {strides = array<i32>} : memref<64x32xf32, #tpu.memory_space<vmem>>, vector<8x32xf32>,
    %c7_i32_221 = arith.constant 7 : i32
    %c8_i32_222 = arith.constant 8 : i32
    %522 = arith.muli %c7_i32_221, %c8_i32_222 : i32
    %523 = tpu.assume_multiple %522, 8 : i32
    %524 = arith.index_cast %523 : i32 to index
    %c0_223 = arith.constant 0 : index
    %525 = vector.load %arg10[%524, %c0_223] : memref<64x128xf32, #tpu.memory_space<vmem>>, vector<8x128xf32>
    %526 = arith.truncf %519 : vector<8x32xf32> to vector<8x32xbf16>
    %cst_224 = arith.constant dense<0.000000e+00> : vector<8x128xf32>
    %527 = tpu.matmul %526, %284, %cst_224 {dimension_numbers = #tpu.dot_dimension_numbers<[1], [0], [0], [1], [0, 0, 1, 1], [], []>} : vector<8x32xbf16>, vector<32x128xbf16>, vector<8x128xf32> -> vector<8x128xf32>
    %528 = arith.addf %525, %527 : vector<8x128xf32>
    %529 = math.tanh %528 : vector<8x128xf32>
    %530 = vector.extract_strided_slice %529 {offsets = [0, 0], sizes = [8, 32], strides = [1, 1]} : vector<8x128xf32> to vector<8x32xf32>
    %cst_225 = arith.constant 5.000000e-01 : f32
    %531 = vector.broadcast %cst_225 : f32 to vector<8x32xf32>
    %532 = arith.mulf %531, %530 : vector<8x32xf32>
    %cst_226 = arith.constant 5.000000e-01 : f32
    %533 = vector.broadcast %cst_226 : f32 to vector<8x32xf32>
    %534 = arith.addf %532, %533 : vector<8x32xf32>
    %535 = vector.extract_strided_slice %529 {offsets = [0, 32], sizes = [8, 32], strides = [1, 1]} : vector<8x128xf32> to vector<8x32xf32>
    %cst_227 = arith.constant 5.000000e-01 : f32
    %536 = vector.broadcast %cst_227 : f32 to vector<8x32xf32>
    %537 = arith.mulf %536, %535 : vector<8x32xf32>
    %cst_228 = arith.constant 5.000000e-01 : f32
    %538 = vector.broadcast %cst_228 : f32 to vector<8x32xf32>
    %539 = arith.addf %537, %538 : vector<8x32xf32>
    %540 = vector.extract_strided_slice %529 {offsets = [0, 64], sizes = [8, 32], strides = [1, 1]} : vector<8x128xf32> to vector<8x32xf32>
    %541 = vector.extract_strided_slice %529 {offsets = [0, 96], sizes = [8, 32], strides = [1, 1]} : vector<8x128xf32> to vector<8x32xf32>
    %cst_229 = arith.constant 5.000000e-01 : f32
    %542 = vector.broadcast %cst_229 : f32 to vector<8x32xf32>
    %543 = arith.mulf %542, %541 : vector<8x32xf32>
    %cst_230 = arith.constant 5.000000e-01 : f32
    %544 = vector.broadcast %cst_230 : f32 to vector<8x32xf32>
    %545 = arith.addf %543, %544 : vector<8x32xf32>
    %546 = arith.mulf %539, %517 : vector<8x32xf32>
    %547 = arith.mulf %534, %540 : vector<8x32xf32>
    %548 = arith.addf %546, %547 : vector<8x32xf32>
    %549 = math.tanh %548 : vector<8x32xf32>
    %550 = arith.mulf %545, %549 : vector<8x32xf32>
    %551 = arith.index_cast %523 : i32 to index
    %c0_231 = arith.constant 0 : index
    %552 = vector.load %arg11[%551, %c0_231] : memref<64x32xf32, #tpu.memory_space<vmem>>, vector<8x32xf32>
    tpu.vector_store %arg11[%551, %c0_231], %550 {strides = array<i32>} : memref<64x32xf32, #tpu.memory_space<vmem>>, vector<8x32xf32>,
    %c8_i32_232 = arith.constant 8 : i32
    %c1_233 = arith.constant 1 : index
    %c0_234 = arith.constant 0 : index
    %c0_235 = arith.constant 0 : index
    %553 = vector.load %arg12[%c1_233, %c0_234, %c0_235] : memref<2x8x32xf32, #tpu.memory_space<vmem>>, vector<1x8x32xf32>
    %554 = vector.shape_cast %553 : vector<1x8x32xf32> to vector<8x32xf32>
    %555 = vector.shape_cast %550 : vector<8x32xf32> to vector<1x8x32xf32>
    tpu.vector_store %arg12[%c1_233, %c0_234, %c0_235], %555 {strides = array<i32>} : memref<2x8x32xf32, #tpu.memory_space<vmem>>, vector<1x8x32xf32>,
    %c1_236 = arith.constant 1 : index
    %c0_237 = arith.constant 0 : index
    %c0_238 = arith.constant 0 : index
    %556 = vector.load %arg13[%c1_236, %c0_237, %c0_238] : memref<2x8x32xf32, #tpu.memory_space<vmem>>, vector<1x8x32xf32>
    %557 = vector.shape_cast %556 : vector<1x8x32xf32> to vector<8x32xf32>
    %558 = vector.shape_cast %548 : vector<8x32xf32> to vector<1x8x32xf32>
    tpu.vector_store %arg13[%c1_236, %c0_237, %c0_238], %558 {strides = array<i32>} : memref<2x8x32xf32, #tpu.memory_space<vmem>>, vector<1x8x32xf32>,
    %c0_239 = arith.constant 0 : index
    %c0_240 = arith.constant 0 : index
    %559 = vector.load %arg11[%c0_239, %c0_240] : memref<64x32xf32, #tpu.memory_space<vmem>>, vector<64x32xf32>
    %560 = arith.truncf %559 : vector<64x32xf32> to vector<64x32xbf16>
    %cst_241 = arith.constant dense<0.000000e+00> : vector<64x128xf32>
    %561 = tpu.matmul %560, %288, %cst_241 {dimension_numbers = #tpu.dot_dimension_numbers<[1], [0], [0], [1], [0, 0, 1, 1], [], []>} : vector<64x32xbf16>, vector<32x128xbf16>, vector<64x128xf32> -> vector<64x128xf32>
    %562 = vector.broadcast %290 : vector<1x128xf32> to vector<64x128xf32>
    %563 = arith.addf %561, %562 : vector<64x128xf32>
    %564 = arith.addf %280, %563 : vector<64x128xf32>
    %c0_242 = arith.constant 0 : index
    %c0_243 = arith.constant 0 : index
    %565 = vector.load %arg9[%c0_242, %c0_243] : memref<64x128xf32, #tpu.memory_space<vmem>>, vector<64x128xf32>
    tpu.vector_store %arg9[%c0_242, %c0_243], %564 {strides = array<i32>} : memref<64x128xf32, #tpu.memory_space<vmem>>, vector<64x128xf32>,
    return
  }
  func.func @transform_0(%arg0: i32, %arg1: i32) -> (i32, i32) {
    %c1_i32 = arith.constant 1 : i32
    %0 = arith.muli %arg0, %c1_i32 : i32
    %1 = arith.addi %0, %arg1 : i32
    %c0_i32 = arith.constant 0 : i32
    %c0_i32_0 = arith.constant 0 : i32
    return %1, %c0_i32 : i32, i32
  }
  func.func @transform_1(%arg0: i32, %arg1: i32) -> (i32, i32, i32) {
    %c0_i32 = arith.constant 0 : i32
    %c0_i32_0 = arith.constant 0 : i32
    %c0_i32_1 = arith.constant 0 : i32
    %c0_i32_2 = arith.constant 0 : i32
    return %c0_i32, %c0_i32_0, %c0_i32_1 : i32, i32, i32
  }
  func.func @transform_2(%arg0: i32, %arg1: i32) -> (i32, i32, i32) {
    %c0_i32 = arith.constant 0 : i32
    %c0_i32_0 = arith.constant 0 : i32
    %c0_i32_1 = arith.constant 0 : i32
    %c0_i32_2 = arith.constant 0 : i32
    return %c0_i32, %c0_i32_0, %c0_i32_1 : i32, i32, i32
  }
  func.func @transform_3(%arg0: i32, %arg1: i32) -> (i32, i32, i32) {
    %c0_i32 = arith.constant 0 : i32
    %c0_i32_0 = arith.constant 0 : i32
    %c0_i32_1 = arith.constant 0 : i32
    %c0_i32_2 = arith.constant 0 : i32
    return %c0_i32, %c0_i32_0, %c0_i32_1 : i32, i32, i32
  }
  func.func @transform_4(%arg0: i32, %arg1: i32) -> (i32, i32, i32) {
    %c0_i32 = arith.constant 0 : i32
    %c0_i32_0 = arith.constant 0 : i32
    %c0_i32_1 = arith.constant 0 : i32
    %c0_i32_2 = arith.constant 0 : i32
    return %c0_i32, %c0_i32_0, %c0_i32_1 : i32, i32, i32
  }
  func.func @transform_5(%arg0: i32, %arg1: i32) -> (i32, i32, i32) {
    %c0_i32 = arith.constant 0 : i32
    %c0_i32_0 = arith.constant 0 : i32
    %c0_i32_1 = arith.constant 0 : i32
    %c0_i32_2 = arith.constant 0 : i32
    return %c0_i32, %c0_i32_0, %c0_i32_1 : i32, i32, i32
  }
  func.func @transform_6(%arg0: i32, %arg1: i32) -> (i32, i32, i32) {
    %c0_i32 = arith.constant 0 : i32
    %c0_i32_0 = arith.constant 0 : i32
    %c0_i32_1 = arith.constant 0 : i32
    %c0_i32_2 = arith.constant 0 : i32
    return %c0_i32, %c0_i32_0, %c0_i32_1 : i32, i32, i32
  }
  func.func @transform_7(%arg0: i32, %arg1: i32) -> (i32, i32) {
    %c1_i32 = arith.constant 1 : i32
    %0 = arith.muli %arg0, %c1_i32 : i32
    %1 = arith.addi %0, %arg1 : i32
    %c0_i32 = arith.constant 0 : i32
    %c0_i32_0 = arith.constant 0 : i32
    return %1, %c0_i32 : i32, i32
  }
}

</mosaic_0001>

<llo_original>
// kernel: tpu_custom_call.1
$region0: #{tpu_custom_call.1}
  #allocation0 [shape = 'u32[]', space=smem, size = 0x4, offset = 0x4, fixed_abs, tag = 'smem constant byte address 0x4 - core index']
  #allocation1 [shape = 'u32[144,128]{1,0:T(1,128)}', space=vmem, size = 0x12000, scoped, tag = 'internal scratch']
  #allocation2 [shape = 'f32[64,128]{1,0:T(8,128)}', space=vmem, size = 0x8000, scoped, tag = 'scratch operand']
  #allocation3 [shape = 'f32[64,32]{1,0:T(8,128)}', space=vmem, size = 0x8000, scoped, tag = 'scratch operand']
  #allocation4 [shape = 'f32[2,8,32]{2,1,0:T(8,128)}', space=vmem, size = 0x2000, scoped, tag = 'scratch operand']
  #allocation5 [shape = 'f32[2,8,32]{2,1,0:T(8,128)}', space=vmem, size = 0x2000, scoped, tag = 'scratch operand']
  %s0 = inlined_call_operand.vmem [shape: bf16[64,3], index: 0, kind: input, shape index: {}]
  %s1 = inlined_call_operand.vmem [shape: bf16[2,3,128], index: 1, kind: input, shape index: {}]
  %s2 = inlined_call_operand.vmem [shape: bf16[2,32,128], index: 2, kind: input, shape index: {}]
  %s3 = inlined_call_operand.hbm [shape: bf16[2,32,128], index: 3, kind: input, shape index: {}]
  %s4 = inlined_call_operand.vmem [shape: f32[2,1,128], index: 4, kind: input, shape index: {}]
  %s5 = inlined_call_operand.hbm [shape: bf16[2,32,128], index: 5, kind: input, shape index: {}]
  %s6 = inlined_call_operand.vmem [shape: f32[2,1,128], index: 6, kind: input, shape index: {}]
  %s7 = inlined_call_operand.hbm [shape: f32[64,128], index: 7, kind: output, shape index: {}]
  %s8 = sld [smem:[#allocation0]]
  $region50: #{tpu_custom_call.1} parent=0
    _
  %s10 = ssub.s32 1, %s8
  %s11 = scalar_select 0, %s10, %s8
  $region1: #{tpu_custom_call.1} parent=0
    #allocation6 [shape = 'u8[16384]{0}', space=vmem, size = 0x4000, scoped, tag = 'input window, operand 3, single buffered']
    #allocation7 [shape = 's32[1]{0}', space=sflag, size = 0x4, scoped, tag = 'scoped memory for tpu_custom_call.1']
    #allocation8 [shape = 's32[1]{0}', space=sflag, size = 0x4, scoped, tag = 'scoped memory for tpu_custom_call.1']
    #allocation9 [shape = 'u8[16384]{0}', space=vmem, size = 0x4000, scoped, tag = 'input window, operand 5, single buffered']
    #allocation10 [shape = 's32[1]{0}', space=sflag, size = 0x4, scoped, tag = 'scoped memory for tpu_custom_call.1']
    #allocation11 [shape = 'u8[32768]{0}', space=vmem, size = 0x8000, scoped, tag = 'output window, operand 0, single buffered']
    %12 = vsyncpa [#allocation7], 0
    %13 = vsyncpa [#allocation10], 0
    %14 = vsyncpa [#allocation8], 0
    // Predicated region
    $region2: #{tpu_custom_call.1} parent=1 // pred_check
      _
    $region3: #{tpu_custom_call.1} parent=1 // pred_check_branch
      %16 = sbr.rel (0) target = $region5
    $region4: #{tpu_custom_call.1} parent=1 // pred_region
      %s17 = sadd.s32 0, 0
      %s18 = smul.u32 8, %s17
      %p19 = scmp.lt.s32.totalorder %s18, 7
      %s20 = scalar_select %p19, %s18, 7
      %s21 = smul.addr %s20, 4
      %s22 = scalar_lea.vmem %s0, %s21
      %s23 = sadd.s32 0, 0
      %s24 = smul.u32 8, %s23
    $region5: #{tpu_custom_call.1} parent=1 // pred_fallthru
      _
    // Predicated region
    $region6: #{tpu_custom_call.1} parent=1 // pred_check
      _
    $region7: #{tpu_custom_call.1} parent=1 // pred_check_branch
      %26 = sbr.rel (0) target = $region9
    $region8: #{tpu_custom_call.1} parent=1 // pred_region
      _
    $region9: #{tpu_custom_call.1} parent=1 // pred_fallthru
      _
    // Predicated region
    $region10: #{tpu_custom_call.1} parent=1 // pred_check
      _
    $region11: #{tpu_custom_call.1} parent=1 // pred_check_branch
      %28 = sbr.rel (0) target = $region13
    $region12: #{tpu_custom_call.1} parent=1 // pred_region
      _
    $region13: #{tpu_custom_call.1} parent=1 // pred_fallthru
      _
    // Predicated region
    $region14: #{tpu_custom_call.1} parent=1 // pred_check
      _
    $region15: #{tpu_custom_call.1} parent=1 // pred_check_branch
      %30 = sbr.rel (0) target = $region17
    $region16: #{tpu_custom_call.1} parent=1 // pred_region
      %s32 = ssub.s32 512, 512
      %33 = vsyncadd [#allocation7], %s32
      %s34 = sshll.u32 [#allocation6], 4
      %s35 = int_to_ptr.vmem [resolvable:$true] %s34
      %40 = dma.hbm_to_vmem [thread:$0]  %s3, 512, %s35, [#allocation7], 64, 64, 4
    $region17: #{tpu_custom_call.1} parent=1 // pred_fallthru
      _
    // Predicated region
    $region18: #{tpu_custom_call.1} parent=1 // pred_check
      _
    $region19: #{tpu_custom_call.1} parent=1 // pred_check_branch
      %42 = sbr.rel (0) target = $region21
    $region20: #{tpu_custom_call.1} parent=1 // pred_region
      _
    $region21: #{tpu_custom_call.1} parent=1 // pred_fallthru
      _
    // Predicated region
    $region22: #{tpu_custom_call.1} parent=1 // pred_check
      _
    $region23: #{tpu_custom_call.1} parent=1 // pred_check_branch
      %44 = sbr.rel (0) target = $region25
    $region24: #{tpu_custom_call.1} parent=1 // pred_region
      %s46 = ssub.s32 512, 512
      %47 = vsyncadd [#allocation10], %s46
      %s48 = sshll.u32 [#allocation9], 4
      %s49 = int_to_ptr.vmem [resolvable:$true] %s48
      %54 = dma.hbm_to_vmem [thread:$0]  %s5, 512, %s49, [#allocation10], 64, 64, 4
    $region25: #{tpu_custom_call.1} parent=1 // pred_fallthru
      _
    // Predicated region
    $region26: #{tpu_custom_call.1} parent=1 // pred_check
      _
    $region27: #{tpu_custom_call.1} parent=1 // pred_check_branch
      %56 = sbr.rel (0) target = $region29
    $region28: #{tpu_custom_call.1} parent=1 // pred_region
      _
    $region29: #{tpu_custom_call.1} parent=1 // pred_fallthru
      _
    // Predicated region
    $region30: #{tpu_custom_call.1} parent=1 // pred_check
      _
    $region31: #{tpu_custom_call.1} parent=1 // pred_check_branch
      %58 = sbr.rel (0) target = $region33
    $region32: #{tpu_custom_call.1} parent=1 // pred_region
      %59 = dma.done [#allocation7], 512
    $region33: #{tpu_custom_call.1} parent=1 // pred_fallthru
      _
    // Predicated region
    $region34: #{tpu_custom_call.1} parent=1 // pred_check
      _
    $region35: #{tpu_custom_call.1} parent=1 // pred_check_branch
      %61 = sbr.rel (0) target = $region37
    $region36: #{tpu_custom_call.1} parent=1 // pred_region
      %62 = dma.done [#allocation10], 512
    $region37: #{tpu_custom_call.1} parent=1 // pred_fallthru
      _
    %s63 = sadd.s32 0, 0
    %s64 = smul.u32 8, %s63
    %p65 = scmp.lt.s32.totalorder %s64, 7
    %s66 = scalar_select %p65, %s64, 7
    %s67 = smul.addr %s66, 4
    %s68 = scalar_lea.vmem %s0, %s67
    %s69 = sadd.s32 0, 0
    %s70 = smul.u32 8, %s69
    %p71 = scmp.lt.s32.totalorder %s70, 7
    %s72 = scalar_select %p71, %s70, 7
    %s73 = smul.addr %s72, 4
    %s74 = scalar_lea.vmem %s0, %s73
    %s75 = sadd.s32 0, 0
    %s76 = smul.u32 8, %s75
    %s77 = sadd.s32 0, 0
    %s78 = smul.u32 8, %s77
    %p80 = scmp.eq.s32.totalorder 0, 0
    // Predicated region
    $region38: #{tpu_custom_call.1} parent=1 // pred_check
      %p81 = pneg %p80
    $region39: #{tpu_custom_call.1} parent=1 // pred_check_branch
      %83 = sbr.rel (%p81) target = $region41
    $region40: #{tpu_custom_call.1} parent=1 // pred_region
      %vm84 = vcmask 261120
      %85 = vst.msk [vmem:[#allocation4] sm:$0xff] %vm84, 0.0
      %86 = vst.msk [vmem:[#allocation4 + $0x8] sm:$0xff] %vm84, 0.0
      %87 = vst.msk [vmem:[#allocation5] sm:$0xff] %vm84, 0.0
      %88 = vst.msk [vmem:[#allocation5 + $0x8] sm:$0xff] %vm84, 0.0
    $region41: #{tpu_custom_call.1} parent=1 // pred_fallthru
      _
    %v89 = vld [vmem:[%s74] sm:$0xf]
    %v90 = vld [vmem:[%s74 + $0x4] sm:$0xf]
    %v91 = vld [vmem:[%s74 + $0x8] sm:$0xf]
    %v92 = vld [vmem:[%s74 + $0xc] sm:$0xf]
    %v93 = vld [vmem:[%s74 + $0x10] sm:$0xf]
    %v94 = vld [vmem:[%s74 + $0x14] sm:$0xf]
    %v95 = vld [vmem:[%s74 + $0x18] sm:$0xf]
    %v96 = vld [vmem:[%s74 + $0x1c] sm:$0xf]
    %v97 = vld [vmem:[%s1] sm:$0x3]
    %v98 = vld [vmem:[#allocation6] sm:$0xf]
    %v99 = vld [vmem:[#allocation6 + $0x4] sm:$0xf]
    %v100 = vld [vmem:[#allocation6 + $0x8] sm:$0xf]
    %v101 = vld [vmem:[#allocation6 + $0xc] sm:$0xf]
    %v102 = vld [vmem:[%s4] sm:$0x1]
    %v103 = vld [vmem:[#allocation9] sm:$0xf]
    %v104 = vld [vmem:[#allocation9 + $0x4] sm:$0xf]
    %v105 = vld [vmem:[#allocation9 + $0x8] sm:$0xf]
    %v106 = vld [vmem:[#allocation9 + $0xc] sm:$0xf]
    %v107 = vld [vmem:[%s6] sm:$0x1]
    %v109 = vlaneseq
    %v110 = vshrl.u32 %v109, 7
    %v111 = vsub.s32 0, %v110
    %v112 = vrot.slane %v102, %v111
    %v122 = vunpack.c.l.b16 %v89
    %v123 = vunpack.c.l.b16 %v90
    %v124 = vunpack.c.l.b16 %v91
    %v125 = vunpack.c.l.b16 %v92
    %v126 = vunpack.c.l.b16 %v93
    %v127 = vunpack.c.l.b16 %v94
    %v128 = vunpack.c.l.b16 %v95
    %v129 = vunpack.c.l.b16 %v96
    %v130 = vpack.c.b16 %v123, %v122
    %v131 = vpack.c.b16 %v125, %v124
    %v132 = vpack.c.b16 %v127, %v126
    %v133 = vpack.c.b16 %v129, %v128
    %vm134 = vcmask 23552
    %v136 = vsel %vm134, %v130, 0
    %v139 = vsel %vm134, %v131, 0
    %v142 = vsel %vm134, %v132, 0
    %v145 = vsel %vm134, %v133, 0
    %vm147 = vcmask 1040384
    %vm148 = vcmask 1041408
    %v149 = vsel %vm147, 4294967295, 65535
    %v150 = vsel %vm148, %v149, 0
    %v152 = vand.u32 %v97, %v150
    %154 = vmatprep.subr.bf16.mxu0 0
    %155 = vmatpush1.bf16.msra.mxu0 0
    %156 = vmatprep.subr.bf16.mxu0 0
    %157 = vmatpush1.bf16.msra.mxu0 0
    %158 = vmatprep.subr.bf16.mxu0 0
    %159 = vmatpush1.bf16.msra.mxu0 0
    %160 = vmatprep.subr.bf16.mxu0 0
    %161 = vmatpush1.bf16.msra.mxu0 0
    %162 = vmatprep.subr.bf16.mxu0 0
    %163 = vmatpush1.bf16.msra.mxu0 0
    %164 = vmatprep.subr.bf16.mxu0 0
    %165 = vmatpush1.bf16.msra.mxu0 0
    %166 = vmatprep.subr.bf16.mxu0 0
    %167 = vmatpush1.bf16.msra.mxu0 0
    %168 = vmatprep.subr.bf16.mxu0 0
    %169 = vmatpush1.bf16.msra.mxu0 %v152
    %170 = vmatprep.subr.bf16.mxu0 0
    %171 = vmatpush2.bf16.msra.mxu0 0
    %172 = vmatprep.subr.bf16.mxu0 0
    %173 = vmatpush2.bf16.msra.mxu0 0
    %174 = vmatprep.subr.bf16.mxu0 0
    %175 = vmatpush2.bf16.msra.mxu0 0
    %176 = vmatprep.subr.bf16.mxu0 0
    %177 = vmatpush2.bf16.msra.mxu0 0
    %178 = vmatprep.subr.bf16.mxu0 0
    %179 = vmatpush2.bf16.msra.mxu0 0
    %180 = vmatprep.subr.bf16.mxu0 0
    %181 = vmatpush2.bf16.msra.mxu0 0
    %182 = vmatprep.subr.bf16.mxu0 0
    %183 = vmatpush2.bf16.msra.mxu0 0
    %184 = vmatprep.subr.bf16.mxu0 0
    %185 = vmatpush2.bf16.msra.mxu0 0
    %186 = vmatprep.mubr.bf16.mxu0 0
    %187 = vmatmul.mubr.bf16.gmra.mxu0 %v136
    %v188 = vpop.f32.mrf.mxu0
    %v189 = vadd.f32 %v112, %v188
    %v190 = vpop.f32.mrf.mxu0
    %v191 = vpop.f32.mrf.mxu0
    %v192 = vadd.f32 %v112, %v191
    %v193 = vpop.f32.mrf.mxu0
    %194 = vmatprep.mubr.bf16.mxu0 0
    %195 = vmatmul.mubr.bf16.gmra.mxu0 %v139
    %v196 = vpop.f32.mrf.mxu0
    %v197 = vadd.f32 %v112, %v196
    %v198 = vpop.f32.mrf.mxu0
    %v199 = vpop.f32.mrf.mxu0
    %v200 = vadd.f32 %v112, %v199
    %v201 = vpop.f32.mrf.mxu0
    %202 = vmatprep.mubr.bf16.mxu0 0
    %203 = vmatmul.mubr.bf16.gmra.mxu0 %v142
    %v204 = vpop.f32.mrf.mxu0
    %v205 = vadd.f32 %v112, %v204
    %v206 = vpop.f32.mrf.mxu0
    %v207 = vpop.f32.mrf.mxu0
    %v208 = vadd.f32 %v112, %v207
    %v209 = vpop.f32.mrf.mxu0
    %210 = vmatprep.mubr.bf16.mxu0 0
    %211 = vmatmul.mubr.bf16.gmra.mxu0 %v145
    %v212 = vpop.f32.mrf.mxu0
    %v213 = vadd.f32 %v112, %v212
    %v214 = vpop.f32.mrf.mxu0
    %v215 = vpop.f32.mrf.mxu0
    %v216 = vadd.f32 %v112, %v215
    %v217 = vpop.f32.mrf.mxu0
    %218 = vdwg.mxu0
    %219 = vst [vmem:[#allocation2] sm:$0xff] %v189
    %220 = vst [vmem:[#allocation2 + $0x8] sm:$0xff] %v192
    %221 = vst [vmem:[#allocation2 + $0x10] sm:$0xff] %v197
    %222 = vst [vmem:[#allocation2 + $0x18] sm:$0xff] %v200
    %223 = vst [vmem:[#allocation2 + $0x20] sm:$0xff] %v205
    %224 = vst [vmem:[#allocation2 + $0x28] sm:$0xff] %v208
    %225 = vst [vmem:[#allocation2 + $0x30] sm:$0xff] %v213
    %226 = vst [vmem:[#allocation2 + $0x38] sm:$0xff] %v216
    %v227 = vld [vmem:[#allocation4] sm:$0xff]
    %v228 = vld [vmem:[#allocation5] sm:$0xff]
    %v229 = vld [vmem:[#allocation2] sm:$0xff]
    %v230 = vpack.c.bf16 %v227, %v227
    %v235 = vunpack.c.l.b16 %v98
    %v236 = vunpack.c.l.b16 %v99
    %v237 = vunpack.c.l.b16 %v100
    %v238 = vunpack.c.l.b16 %v101
    %v239 = vpack.c.b16 %v236, %v235
    %v240 = vpack.c.b16 %v238, %v237
    %vm243 = vcmask 261120
    %v245 = vsel %vm243, %v230, 0
    %247 = vmatprep.subr.bf16.mxu0 0
    %248 = vmatpush1.bf16.msra.mxu0 0
    %249 = vmatprep.subr.bf16.mxu0 0
    %250 = vmatpush1.bf16.msra.mxu0 0
    %251 = vmatprep.subr.bf16.mxu0 0
    %252 = vmatpush1.bf16.msra.mxu0 0
    %253 = vmatprep.subr.bf16.mxu0 0
    %254 = vmatpush1.bf16.msra.mxu0 0
    %255 = vmatprep.subr.bf16.mxu0 0
    %256 = vmatpush1.bf16.msra.mxu0 0
    %257 = vmatprep.subr.bf16.mxu0 0
    %258 = vmatpush1.bf16.msra.mxu0 0
    %259 = vmatprep.subr.bf16.mxu0 0
    %260 = vmatpush1.bf16.msra.mxu0 %v240
    %261 = vmatprep.subr.bf16.mxu0 0
    %262 = vmatpush1.bf16.msra.mxu0 %v239
    %263 = vmatprep.subr.bf16.mxu0 0
    %264 = vmatpush2.bf16.msra.mxu0 0
    %265 = vmatprep.subr.bf16.mxu0 0
    %266 = vmatpush2.bf16.msra.mxu0 0
    %267 = vmatprep.subr.bf16.mxu0 0
    %268 = vmatpush2.bf16.msra.mxu0 0
    %269 = vmatprep.subr.bf16.mxu0 0
    %270 = vmatpush2.bf16.msra.mxu0 0
    %271 = vmatprep.subr.bf16.mxu0 0
    %272 = vmatpush2.bf16.msra.mxu0 0
    %273 = vmatprep.subr.bf16.mxu0 0
    %274 = vmatpush2.bf16.msra.mxu0 0
    %275 = vmatprep.subr.bf16.mxu0 0
    %276 = vmatpush2.bf16.msra.mxu0 0
    %277 = vmatprep.subr.bf16.mxu0 0
    %278 = vmatpush2.bf16.msra.mxu0 0
    %279 = vmatprep.mubr.bf16.mxu0 0
    %280 = vmatmul.mubr.bf16.gmra.mxu0 %v245
    %v281 = vpop.f32.mrf.mxu0
    %v282 = vadd.f32 0.0, %v281
    %v283 = vpop.f32.mrf.mxu0
    %v284 = vpop.f32.mrf.mxu0
    %v285 = vpop.f32.mrf.mxu0
    %286 = vdwg.mxu0
    %v287 = vadd.f32 %v229, %v282
    %v288 = vtanh.pop %v287
    %v289 = vmul.f32 %v288, 0.5
    %v290 = vadd.f32 %v289, 0.5
    %292 = vrot.lane.b32.xlu0 %v228, 32
    %v293 = vpop.permute.xlu0 %292
    %v295 = vmul.f32 %v290, %v293
    %297 = vrot.lane.b32.xlu0 %v288, 64
    %v298 = vpop.permute.xlu0 %297
    %v300 = vmul.f32 %v290, %v298
    %302 = vrot.lane.b32.xlu0 %v300, 32
    %v303 = vpop.permute.xlu0 %302
    %v305 = vadd.f32 %v295, %v303
    %v306 = vtanh.pop %v305
    %308 = vrot.lane.b32.xlu0 %v306, 64
    %v309 = vpop.permute.xlu0 %308
    %v311 = vmul.f32 %v290, %v309
    %313 = vrot.lane.b32.xlu0 %v311, 32
    %v314 = vpop.permute.xlu0 %313
    %316 = vst.msk [vmem:[#allocation3] sm:$0xff] %vm243, %v314
    %s317 = scalar_lea.vmem [#allocation2], 8
    %v318 = vld [vmem:[%s317] sm:$0xff]
    %v319 = vpack.c.bf16 %v311, %v311
    %321 = vrot.lane.b32.xlu0 %v319, 32
    %v322 = vpop.permute.xlu0 %321
    %v324 = vsel %vm243, %v322, 0
    %326 = vmatprep.subr.bf16.mxu0 0
    %327 = vmatpush1.bf16.msra.mxu0 0
    %328 = vmatprep.subr.bf16.mxu0 0
    %329 = vmatpush1.bf16.msra.mxu0 0
    %330 = vmatprep.subr.bf16.mxu0 0
    %331 = vmatpush1.bf16.msra.mxu0 0
    %332 = vmatprep.subr.bf16.mxu0 0
    %333 = vmatpush1.bf16.msra.mxu0 0
    %334 = vmatprep.subr.bf16.mxu0 0
    %335 = vmatpush1.bf16.msra.mxu0 0
    %336 = vmatprep.subr.bf16.mxu0 0
    %337 = vmatpush1.bf16.msra.mxu0 0
    %338 = vmatprep.subr.bf16.mxu0 0
    %339 = vmatpush1.bf16.msra.mxu0 %v240
    %340 = vmatprep.subr.bf16.mxu0 0
    %341 = vmatpush1.bf16.msra.mxu0 %v239
    %342 = vmatprep.subr.bf16.mxu0 0
    %343 = vmatpush2.bf16.msra.mxu0 0
    %344 = vmatprep.subr.bf16.mxu0 0
    %345 = vmatpush2.bf16.msra.mxu0 0
    %346 = vmatprep.subr.bf16.mxu0 0
    %347 = vmatpush2.bf16.msra.mxu0 0
    %348 = vmatprep.subr.bf16.mxu0 0
    %349 = vmatpush2.bf16.msra.mxu0 0
    %350 = vmatprep.subr.bf16.mxu0 0
    %351 = vmatpush2.bf16.msra.mxu0 0
    %352 = vmatprep.subr.bf16.mxu0 0
    %353 = vmatpush2.bf16.msra.mxu0 0
    %354 = vmatprep.subr.bf16.mxu0 0
    %355 = vmatpush2.bf16.msra.mxu0 0
    %356 = vmatprep.subr.bf16.mxu0 0
    %357 = vmatpush2.bf16.msra.mxu0 0
    %358 = vmatprep.mubr.bf16.mxu0 0
    %359 = vmatmul.mubr.bf16.gmra.mxu0 %v324
    %v360 = vpop.f32.mrf.mxu0
    %v361 = vadd.f32 0.0, %v360
    %v362 = vpop.f32.mrf.mxu0
    %v363 = vpop.f32.mrf.mxu0
    %v364 = vpop.f32.mrf.mxu0
    %365 = vdwg.mxu0
    %v366 = vadd.f32 %v318, %v361
    %v367 = vtanh.pop %v366
    %v368 = vmul.f32 %v367, 0.5
    %v369 = vadd.f32 %v368, 0.5
    %v370 = vmul.f32 %v369, %v305
    %372 = vrot.lane.b32.xlu0 %v367, 64
    %v373 = vpop.permute.xlu0 %372
    %v375 = vmul.f32 %v369, %v373
    %377 = vrot.lane.b32.xlu0 %v375, 32
    %v378 = vpop.permute.xlu0 %377
    %v380 = vadd.f32 %v370, %v378
    %v381 = vtanh.pop %v380
    %383 = vrot.lane.b32.xlu0 %v381, 64
    %v384 = vpop.permute.xlu0 %383
    %v386 = vmul.f32 %v369, %v384
    %388 = vrot.lane.b32.xlu0 %v386, 32
    %v389 = vpop.permute.xlu0 %388
    %s391 = scalar_lea.vmem [#allocation3], 8
    %392 = vst.msk [vmem:[%s391] sm:$0xff] %vm243, %v389
    %s393 = scalar_lea.vmem [#allocation2], 16
    %v394 = vld [vmem:[%s393] sm:$0xff]
    %v395 = vpack.c.bf16 %v386, %v386
    %397 = vrot.lane.b32.xlu0 %v395, 32
    %v398 = vpop.permute.xlu0 %397
    %v400 = vsel %vm243, %v398, 0
    %402 = vmatprep.subr.bf16.mxu0 0
    %403 = vmatpush1.bf16.msra.mxu0 0
    %404 = vmatprep.subr.bf16.mxu0 0
    %405 = vmatpush1.bf16.msra.mxu0 0
    %406 = vmatprep.subr.bf16.mxu0 0
    %407 = vmatpush1.bf16.msra.mxu0 0
    %408 = vmatprep.subr.bf16.mxu0 0
    %409 = vmatpush1.bf16.msra.mxu0 0
    %410 = vmatprep.subr.bf16.mxu0 0
    %411 = vmatpush1.bf16.msra.mxu0 0
    %412 = vmatprep.subr.bf16.mxu0 0
    %413 = vmatpush1.bf16.msra.mxu0 0
    %414 = vmatprep.subr.bf16.mxu0 0
    %415 = vmatpush1.bf16.msra.mxu0 %v240
    %416 = vmatprep.subr.bf16.mxu0 0
    %417 = vmatpush1.bf16.msra.mxu0 %v239
    %418 = vmatprep.subr.bf16.mxu0 0
    %419 = vmatpush2.bf16.msra.mxu0 0
    %420 = vmatprep.subr.bf16.mxu0 0
    %421 = vmatpush2.bf16.msra.mxu0 0
    %422 = vmatprep.subr.bf16.mxu0 0
    %423 = vmatpush2.bf16.msra.mxu0 0
    %424 = vmatprep.subr.bf16.mxu0 0
    %425 = vmatpush2.bf16.msra.mxu0 0
    %426 = vmatprep.subr.bf16.mxu0 0
    %427 = vmatpush2.bf16.msra.mxu0 0
    %428 = vmatprep.subr.bf16.mxu0 0
    %429 = vmatpush2.bf16.msra.mxu0 0
    %430 = vmatprep.subr.bf16.mxu0 0
    %431 = vmatpush2.bf16.msra.mxu0 0
    %432 = vmatprep.subr.bf16.mxu0 0
    %433 = vmatpush2.bf16.msra.mxu0 0
    %434 = vmatprep.mubr.bf16.mxu0 0
    %435 = vmatmul.mubr.bf16.gmra.mxu0 %v400
    %v436 = vpop.f32.mrf.mxu0
    %v437 = vadd.f32 0.0, %v436
    %v438 = vpop.f32.mrf.mxu0
    %v439 = vpop.f32.mrf.mxu0
    %v440 = vpop.f32.mrf.mxu0
    %441 = vdwg.mxu0
    %v442 = vadd.f32 %v394, %v437
    %v443 = vtanh.pop %v442
    %v444 = vmul.f32 %v443, 0.5
    %v445 = vadd.f32 %v444, 0.5
    %v446 = vmul.f32 %v445, %v380
    %448 = vrot.lane.b32.xlu0 %v443, 64
    %v449 = vpop.permute.xlu0 %448
    %v451 = vmul.f32 %v445, %v449
    %453 = vrot.lane.b32.xlu0 %v451, 32
    %v454 = vpop.permute.xlu0 %453
    %v456 = vadd.f32 %v446, %v454
    %v457 = vtanh.pop %v456
    %459 = vrot.lane.b32.xlu0 %v457, 64
    %v460 = vpop.permute.xlu0 %459
    %v462 = vmul.f32 %v445, %v460
    %464 = vrot.lane.b32.xlu0 %v462, 32
    %v465 = vpop.permute.xlu0 %464
    %s467 = scalar_lea.vmem [#allocation3], 16
    %468 = vst.msk [vmem:[%s467] sm:$0xff] %vm243, %v465
    %s469 = scalar_lea.vmem [#allocation2], 24
    %v470 = vld [vmem:[%s469] sm:$0xff]
    %v471 = vpack.c.bf16 %v462, %v462
    %473 = vrot.lane.b32.xlu0 %v471, 32
    %v474 = vpop.permute.xlu0 %473
    %v476 = vsel %vm243, %v474, 0
    %478 = vmatprep.subr.bf16.mxu0 0
    %479 = vmatpush1.bf16.msra.mxu0 0
    %480 = vmatprep.subr.bf16.mxu0 0
    %481 = vmatpush1.bf16.msra.mxu0 0
    %482 = vmatprep.subr.bf16.mxu0 0
    %483 = vmatpush1.bf16.msra.mxu0 0
    %484 = vmatprep.subr.bf16.mxu0 0
    %485 = vmatpush1.bf16.msra.mxu0 0
    %486 = vmatprep.subr.bf16.mxu0 0
    %487 = vmatpush1.bf16.msra.mxu0 0
    %488 = vmatprep.subr.bf16.mxu0 0
    %489 = vmatpush1.bf16.msra.mxu0 0
    %490 = vmatprep.subr.bf16.mxu0 0
    %491 = vmatpush1.bf16.msra.mxu0 %v240
    %492 = vmatprep.subr.bf16.mxu0 0
    %493 = vmatpush1.bf16.msra.mxu0 %v239
    %494 = vmatprep.subr.bf16.mxu0 0
    %495 = vmatpush2.bf16.msra.mxu0 0
    %496 = vmatprep.subr.bf16.mxu0 0
    %497 = vmatpush2.bf16.msra.mxu0 0
    %498 = vmatprep.subr.bf16.mxu0 0
    %499 = vmatpush2.bf16.msra.mxu0 0
    %500 = vmatprep.subr.bf16.mxu0 0
    %501 = vmatpush2.bf16.msra.mxu0 0
    %502 = vmatprep.subr.bf16.mxu0 0
    %503 = vmatpush2.bf16.msra.mxu0 0
    %504 = vmatprep.subr.bf16.mxu0 0
    %505 = vmatpush2.bf16.msra.mxu0 0
    %506 = vmatprep.subr.bf16.mxu0 0
    %507 = vmatpush2.bf16.msra.mxu0 0
    %508 = vmatprep.subr.bf16.mxu0 0
    %509 = vmatpush2.bf16.msra.mxu0 0
    %510 = vmatprep.mubr.bf16.mxu0 0
    %511 = vmatmul.mubr.bf16.gmra.mxu0 %v476
    %v512 = vpop.f32.mrf.mxu0
    %v513 = vadd.f32 0.0, %v512
    %v514 = vpop.f32.mrf.mxu0
    %v515 = vpop.f32.mrf.mxu0
    %v516 = vpop.f32.mrf.mxu0
    %517 = vdwg.mxu0
    %v518 = vadd.f32 %v470, %v513
    %v519 = vtanh.pop %v518
    %v520 = vmul.f32 %v519, 0.5
    %v521 = vadd.f32 %v520, 0.5
    %v522 = vmul.f32 %v521, %v456
    %524 = vrot.lane.b32.xlu0 %v519, 64
    %v525 = vpop.permute.xlu0 %524
    %v527 = vmul.f32 %v521, %v525
    %529 = vrot.lane.b32.xlu0 %v527, 32
    %v530 = vpop.permute.xlu0 %529
    %v532 = vadd.f32 %v522, %v530
    %v533 = vtanh.pop %v532
    %535 = vrot.lane.b32.xlu0 %v533, 64
    %v536 = vpop.permute.xlu0 %535
    %v538 = vmul.f32 %v521, %v536
    %540 = vrot.lane.b32.xlu0 %v538, 32
    %v541 = vpop.permute.xlu0 %540
    %s543 = scalar_lea.vmem [#allocation3], 24
    %544 = vst.msk [vmem:[%s543] sm:$0xff] %vm243, %v541
    %s545 = scalar_lea.vmem [#allocation2], 32
    %v546 = vld [vmem:[%s545] sm:$0xff]
    %v547 = vpack.c.bf16 %v538, %v538
    %549 = vrot.lane.b32.xlu0 %v547, 32
    %v550 = vpop.permute.xlu0 %549
    %v552 = vsel %vm243, %v550, 0
    %554 = vmatprep.subr.bf16.mxu0 0
    %555 = vmatpush1.bf16.msra.mxu0 0
    %556 = vmatprep.subr.bf16.mxu0 0
    %557 = vmatpush1.bf16.msra.mxu0 0
    %558 = vmatprep.subr.bf16.mxu0 0
    %559 = vmatpush1.bf16.msra.mxu0 0
    %560 = vmatprep.subr.bf16.mxu0 0
    %561 = vmatpush1.bf16.msra.mxu0 0
    %562 = vmatprep.subr.bf16.mxu0 0
    %563 = vmatpush1.bf16.msra.mxu0 0
    %564 = vmatprep.subr.bf16.mxu0 0
    %565 = vmatpush1.bf16.msra.mxu0 0
    %566 = vmatprep.subr.bf16.mxu0 0
    %567 = vmatpush1.bf16.msra.mxu0 %v240
    %568 = vmatprep.subr.bf16.mxu0 0
    %569 = vmatpush1.bf16.msra.mxu0 %v239
    %570 = vmatprep.subr.bf16.mxu0 0
    %571 = vmatpush2.bf16.msra.mxu0 0
    %572 = vmatprep.subr.bf16.mxu0 0
    %573 = vmatpush2.bf16.msra.mxu0 0
    %574 = vmatprep.subr.bf16.mxu0 0
    %575 = vmatpush2.bf16.msra.mxu0 0
    %576 = vmatprep.subr.bf16.mxu0 0
    %577 = vmatpush2.bf16.msra.mxu0 0
    %578 = vmatprep.subr.bf16.mxu0 0
    %579 = vmatpush2.bf16.msra.mxu0 0
    %580 = vmatprep.subr.bf16.mxu0 0
    %581 = vmatpush2.bf16.msra.mxu0 0
    %582 = vmatprep.subr.bf16.mxu0 0
    %583 = vmatpush2.bf16.msra.mxu0 0
    %584 = vmatprep.subr.bf16.mxu0 0
    %585 = vmatpush2.bf16.msra.mxu0 0
    %586 = vmatprep.mubr.bf16.mxu0 0
    %587 = vmatmul.mubr.bf16.gmra.mxu0 %v552
    %v588 = vpop.f32.mrf.mxu0
    %v589 = vadd.f32 0.0, %v588
    %v590 = vpop.f32.mrf.mxu0
    %v591 = vpop.f32.mrf.mxu0
    %v592 = vpop.f32.mrf.mxu0
    %593 = vdwg.mxu0
    %v594 = vadd.f32 %v546, %v589
    %v595 = vtanh.pop %v594
    %v596 = vmul.f32 %v595, 0.5
    %v597 = vadd.f32 %v596, 0.5
    %v598 = vmul.f32 %v597, %v532
    %600 = vrot.lane.b32.xlu0 %v595, 64
    %v601 = vpop.permute.xlu0 %600
    %v603 = vmul.f32 %v597, %v601
    %605 = vrot.lane.b32.xlu0 %v603, 32
    %v606 = vpop.permute.xlu0 %605
    %v608 = vadd.f32 %v598, %v606
    %v609 = vtanh.pop %v608
    %611 = vrot.lane.b32.xlu0 %v609, 64
    %v612 = vpop.permute.xlu0 %611
    %v614 = vmul.f32 %v597, %v612
    %616 = vrot.lane.b32.xlu0 %v614, 32
    %v617 = vpop.permute.xlu0 %616
    %s619 = scalar_lea.vmem [#allocation3], 32
    %620 = vst.msk [vmem:[%s619] sm:$0xff] %vm243, %v617
    %s621 = scalar_lea.vmem [#allocation2], 40
    %v622 = vld [vmem:[%s621] sm:$0xff]
    %v623 = vpack.c.bf16 %v614, %v614
    %625 = vrot.lane.b32.xlu0 %v623, 32
    %v626 = vpop.permute.xlu0 %625
    %v628 = vsel %vm243, %v626, 0
    %630 = vmatprep.subr.bf16.mxu0 0
    %631 = vmatpush1.bf16.msra.mxu0 0
    %632 = vmatprep.subr.bf16.mxu0 0
    %633 = vmatpush1.bf16.msra.mxu0 0
    %634 = vmatprep.subr.bf16.mxu0 0
    %635 = vmatpush1.bf16.msra.mxu0 0
    %636 = vmatprep.subr.bf16.mxu0 0
    %637 = vmatpush1.bf16.msra.mxu0 0
    %638 = vmatprep.subr.bf16.mxu0 0
    %639 = vmatpush1.bf16.msra.mxu0 0
    %640 = vmatprep.subr.bf16.mxu0 0
    %641 = vmatpush1.bf16.msra.mxu0 0
    %642 = vmatprep.subr.bf16.mxu0 0
    %643 = vmatpush1.bf16.msra.mxu0 %v240
    %644 = vmatprep.subr.bf16.mxu0 0
    %645 = vmatpush1.bf16.msra.mxu0 %v239
    %646 = vmatprep.subr.bf16.mxu0 0
    %647 = vmatpush2.bf16.msra.mxu0 0
    %648 = vmatprep.subr.bf16.mxu0 0
    %649 = vmatpush2.bf16.msra.mxu0 0
    %650 = vmatprep.subr.bf16.mxu0 0
    %651 = vmatpush2.bf16.msra.mxu0 0
    %652 = vmatprep.subr.bf16.mxu0 0
    %653 = vmatpush2.bf16.msra.mxu0 0
    %654 = vmatprep.subr.bf16.mxu0 0
    %655 = vmatpush2.bf16.msra.mxu0 0
    %656 = vmatprep.subr.bf16.mxu0 0
    %657 = vmatpush2.bf16.msra.mxu0 0
    %658 = vmatprep.subr.bf16.mxu0 0
    %659 = vmatpush2.bf16.msra.mxu0 0
    %660 = vmatprep.subr.bf16.mxu0 0
    %661 = vmatpush2.bf16.msra.mxu0 0
    %662 = vmatprep.mubr.bf16.mxu0 0
    %663 = vmatmul.mubr.bf16.gmra.mxu0 %v628
    %v664 = vpop.f32.mrf.mxu0
    %v665 = vadd.f32 0.0, %v664
    %v666 = vpop.f32.mrf.mxu0
    %v667 = vpop.f32.mrf.mxu0
    %v668 = vpop.f32.mrf.mxu0
    %669 = vdwg.mxu0
    %v670 = vadd.f32 %v622, %v665
    %v671 = vtanh.pop %v670
    %v672 = vmul.f32 %v671, 0.5
    %v673 = vadd.f32 %v672, 0.5
    %v674 = vmul.f32 %v673, %v608
    %676 = vrot.lane.b32.xlu0 %v671, 64
    %v677 = vpop.permute.xlu0 %676
    %v679 = vmul.f32 %v673, %v677
    %681 = vrot.lane.b32.xlu0 %v679, 32
    %v682 = vpop.permute.xlu0 %681
    %v684 = vadd.f32 %v674, %v682
    %v685 = vtanh.pop %v684
    %687 = vrot.lane.b32.xlu0 %v685, 64
    %v688 = vpop.permute.xlu0 %687
    %v690 = vmul.f32 %v673, %v688
    %692 = vrot.lane.b32.xlu0 %v690, 32
    %v693 = vpop.permute.xlu0 %692
    %s695 = scalar_lea.vmem [#allocation3], 40
    %696 = vst.msk [vmem:[%s695] sm:$0xff] %vm243, %v693
    %s697 = scalar_lea.vmem [#allocation2], 48
    %v698 = vld [vmem:[%s697] sm:$0xff]
    %v699 = vpack.c.bf16 %v690, %v690
    %701 = vrot.lane.b32.xlu0 %v699, 32
    %v702 = vpop.permute.xlu0 %701
    %v704 = vsel %vm243, %v702, 0
    %706 = vmatprep.subr.bf16.mxu0 0
    %707 = vmatpush1.bf16.msra.mxu0 0
    %708 = vmatprep.subr.bf16.mxu0 0
    %709 = vmatpush1.bf16.msra.mxu0 0
    %710 = vmatprep.subr.bf16.mxu0 0
    %711 = vmatpush1.bf16.msra.mxu0 0
    %712 = vmatprep.subr.bf16.mxu0 0
    %713 = vmatpush1.bf16.msra.mxu0 0
    %714 = vmatprep.subr.bf16.mxu0 0
    %715 = vmatpush1.bf16.msra.mxu0 0
    %716 = vmatprep.subr.bf16.mxu0 0
    %717 = vmatpush1.bf16.msra.mxu0 0
    %718 = vmatprep.subr.bf16.mxu0 0
    %719 = vmatpush1.bf16.msra.mxu0 %v240
    %720 = vmatprep.subr.bf16.mxu0 0
    %721 = vmatpush1.bf16.msra.mxu0 %v239
    %722 = vmatprep.subr.bf16.mxu0 0
    %723 = vmatpush2.bf16.msra.mxu0 0
    %724 = vmatprep.subr.bf16.mxu0 0
    %725 = vmatpush2.bf16.msra.mxu0 0
    %726 = vmatprep.subr.bf16.mxu0 0
    %727 = vmatpush2.bf16.msra.mxu0 0
    %728 = vmatprep.subr.bf16.mxu0 0
    %729 = vmatpush2.bf16.msra.mxu0 0
    %730 = vmatprep.subr.bf16.mxu0 0
    %731 = vmatpush2.bf16.msra.mxu0 0
    %732 = vmatprep.subr.bf16.mxu0 0
    %733 = vmatpush2.bf16.msra.mxu0 0
    %734 = vmatprep.subr.bf16.mxu0 0
    %735 = vmatpush2.bf16.msra.mxu0 0
    %736 = vmatprep.subr.bf16.mxu0 0
    %737 = vmatpush2.bf16.msra.mxu0 0
    %738 = vmatprep.mubr.bf16.mxu0 0
    %739 = vmatmul.mubr.bf16.gmra.mxu0 %v704
    %v740 = vpop.f32.mrf.mxu0
    %v741 = vadd.f32 0.0, %v740
    %v742 = vpop.f32.mrf.mxu0
    %v743 = vpop.f32.mrf.mxu0
    %v744 = vpop.f32.mrf.mxu0
    %745 = vdwg.mxu0
    %v746 = vadd.f32 %v698, %v741
    %v747 = vtanh.pop %v746
    %v748 = vmul.f32 %v747, 0.5
    %v749 = vadd.f32 %v748, 0.5
    %v750 = vmul.f32 %v749, %v684
    %752 = vrot.lane.b32.xlu0 %v747, 64
    %v753 = vpop.permute.xlu0 %752
    %v755 = vmul.f32 %v749, %v753
    %757 = vrot.lane.b32.xlu0 %v755, 32
    %v758 = vpop.permute.xlu0 %757
    %v760 = vadd.f32 %v750, %v758
    %v761 = vtanh.pop %v760
    %763 = vrot.lane.b32.xlu0 %v761, 64
    %v764 = vpop.permute.xlu0 %763
    %v766 = vmul.f32 %v749, %v764
    %768 = vrot.lane.b32.xlu0 %v766, 32
    %v769 = vpop.permute.xlu0 %768
    %s771 = scalar_lea.vmem [#allocation3], 48
    %772 = vst.msk [vmem:[%s771] sm:$0xff] %vm243, %v769
    %s773 = scalar_lea.vmem [#allocation2], 56
    %v774 = vld [vmem:[%s773] sm:$0xff]
    %v775 = vpack.c.bf16 %v766, %v766
    %777 = vrot.lane.b32.xlu0 %v775, 32
    %v778 = vpop.permute.xlu0 %777
    %v780 = vsel %vm243, %v778, 0
    %782 = vmatprep.subr.bf16.mxu0 0
    %783 = vmatpush1.bf16.msra.mxu0 0
    %784 = vmatprep.subr.bf16.mxu0 0
    %785 = vmatpush1.bf16.msra.mxu0 0
    %786 = vmatprep.subr.bf16.mxu0 0
    %787 = vmatpush1.bf16.msra.mxu0 0
    %788 = vmatprep.subr.bf16.mxu0 0
    %789 = vmatpush1.bf16.msra.mxu0 0
    %790 = vmatprep.subr.bf16.mxu0 0
    %791 = vmatpush1.bf16.msra.mxu0 0
    %792 = vmatprep.subr.bf16.mxu0 0
    %793 = vmatpush1.bf16.msra.mxu0 0
    %794 = vmatprep.subr.bf16.mxu0 0
    %795 = vmatpush1.bf16.msra.mxu0 %v240
    %796 = vmatprep.subr.bf16.mxu0 0
    %797 = vmatpush1.bf16.msra.mxu0 %v239
    %798 = vmatprep.subr.bf16.mxu0 0
    %799 = vmatpush2.bf16.msra.mxu0 0
    %800 = vmatprep.subr.bf16.mxu0 0
    %801 = vmatpush2.bf16.msra.mxu0 0
    %802 = vmatprep.subr.bf16.mxu0 0
    %803 = vmatpush2.bf16.msra.mxu0 0
    %804 = vmatprep.subr.bf16.mxu0 0
    %805 = vmatpush2.bf16.msra.mxu0 0
    %806 = vmatprep.subr.bf16.mxu0 0
    %807 = vmatpush2.bf16.msra.mxu0 0
    %808 = vmatprep.subr.bf16.mxu0 0
    %809 = vmatpush2.bf16.msra.mxu0 0
    %810 = vmatprep.subr.bf16.mxu0 0
    %811 = vmatpush2.bf16.msra.mxu0 0
    %812 = vmatprep.subr.bf16.mxu0 0
    %813 = vmatpush2.bf16.msra.mxu0 0
    %814 = vmatprep.mubr.bf16.mxu0 0
    %815 = vmatmul.mubr.bf16.gmra.mxu0 %v780
    %v816 = vpop.f32.mrf.mxu0
    %v817 = vadd.f32 0.0, %v816
    %v818 = vpop.f32.mrf.mxu0
    %v819 = vpop.f32.mrf.mxu0
    %v820 = vpop.f32.mrf.mxu0
    %821 = vdwg.mxu0
    %v822 = vadd.f32 %v774, %v817
    %v823 = vtanh.pop %v822
    %v824 = vmul.f32 %v823, 0.5
    %v825 = vadd.f32 %v824, 0.5
    %v826 = vmul.f32 %v825, %v760
    %828 = vrot.lane.b32.xlu0 %v823, 64
    %v829 = vpop.permute.xlu0 %828
    %v831 = vmul.f32 %v825, %v829
    %833 = vrot.lane.b32.xlu0 %v831, 32
    %v834 = vpop.permute.xlu0 %833
    %v836 = vadd.f32 %v826, %v834
    %v837 = vtanh.pop %v836
    %839 = vrot.lane.b32.xlu0 %v837, 64
    %v840 = vpop.permute.xlu0 %839
    %v842 = vmul.f32 %v825, %v840
    %844 = vrot.lane.b32.xlu0 %v842, 32
    %v845 = vpop.permute.xlu0 %844
    %s847 = scalar_lea.vmem [#allocation3], 56
    %848 = vst.msk [vmem:[%s847] sm:$0xff] %vm243, %v845
    %849 = vst.msk [vmem:[#allocation4] sm:$0xff] %vm243, %v845
    %851 = vrot.lane.b32.xlu0 %v836, 96
    %v852 = vpop.permute.xlu0 %851
    %854 = vst.msk [vmem:[#allocation5] sm:$0xff] %vm243, %v852
    %v855 = vld [vmem:[#allocation3] sm:$0xff]
    %v856 = vld [vmem:[#allocation3 + $0x8] sm:$0xff]
    %v857 = vld [vmem:[#allocation3 + $0x10] sm:$0xff]
    %v858 = vld [vmem:[#allocation3 + $0x18] sm:$0xff]
    %v859 = vld [vmem:[#allocation3 + $0x20] sm:$0xff]
    %v860 = vld [vmem:[#allocation3 + $0x28] sm:$0xff]
    %v861 = vld [vmem:[#allocation3 + $0x30] sm:$0xff]
    %v862 = vld [vmem:[#allocation3 + $0x38] sm:$0xff]
    %v863 = vpack.c.bf16 %v856, %v855
    %v864 = vpack.c.bf16 %v858, %v857
    %v865 = vpack.c.bf16 %v860, %v859
    %v866 = vpack.c.bf16 %v862, %v861
    %v868 = vlaneseq
    %v869 = vshrl.u32 %v868, 7
    %v870 = vsub.s32 0, %v869
    %v871 = vrot.slane %v107, %v870
    %v877 = vunpack.c.l.b16 %v103
    %v878 = vunpack.c.l.b16 %v104
    %v879 = vunpack.c.l.b16 %v105
    %v880 = vunpack.c.l.b16 %v106
    %v881 = vpack.c.b16 %v878, %v877
    %v882 = vpack.c.b16 %v880, %v879
    %v886 = vsel %vm243, %v863, 0
    %v889 = vsel %vm243, %v864, 0
    %v892 = vsel %vm243, %v865, 0
    %v895 = vsel %vm243, %v866, 0
    %897 = vmatprep.subr.bf16.mxu0 0
    %898 = vmatpush1.bf16.msra.mxu0 0
    %899 = vmatprep.subr.bf16.mxu0 0
    %900 = vmatpush1.bf16.msra.mxu0 0
    %901 = vmatprep.subr.bf16.mxu0 0
    %902 = vmatpush1.bf16.msra.mxu0 0
    %903 = vmatprep.subr.bf16.mxu0 0
    %904 = vmatpush1.bf16.msra.mxu0 0
    %905 = vmatprep.subr.bf16.mxu0 0
    %906 = vmatpush1.bf16.msra.mxu0 0
    %907 = vmatprep.subr.bf16.mxu0 0
    %908 = vmatpush1.bf16.msra.mxu0 0
    %909 = vmatprep.subr.bf16.mxu0 0
    %910 = vmatpush1.bf16.msra.mxu0 %v882
    %911 = vmatprep.subr.bf16.mxu0 0
    %912 = vmatpush1.bf16.msra.mxu0 %v881
    %913 = vmatprep.subr.bf16.mxu0 0
    %914 = vmatpush2.bf16.msra.mxu0 0
    %915 = vmatprep.subr.bf16.mxu0 0
    %916 = vmatpush2.bf16.msra.mxu0 0
    %917 = vmatprep.subr.bf16.mxu0 0
    %918 = vmatpush2.bf16.msra.mxu0 0
    %919 = vmatprep.subr.bf16.mxu0 0
    %920 = vmatpush2.bf16.msra.mxu0 0
    %921 = vmatprep.subr.bf16.mxu0 0
    %922 = vmatpush2.bf16.msra.mxu0 0
    %923 = vmatprep.subr.bf16.mxu0 0
    %924 = vmatpush2.bf16.msra.mxu0 0
    %925 = vmatprep.subr.bf16.mxu0 0
    %926 = vmatpush2.bf16.msra.mxu0 0
    %927 = vmatprep.subr.bf16.mxu0 0
    %928 = vmatpush2.bf16.msra.mxu0 0
    %929 = vmatprep.mubr.bf16.mxu0 0
    %930 = vmatmul.mubr.bf16.gmra.mxu0 %v886
    %v931 = vpop.f32.mrf.mxu0
    %v932 = vadd.f32 %v871, %v931
    %v933 = vpop.f32.mrf.mxu0
    %v934 = vpop.f32.mrf.mxu0
    %v935 = vadd.f32 %v871, %v934
    %v936 = vpop.f32.mrf.mxu0
    %937 = vmatprep.mubr.bf16.mxu0 0
    %938 = vmatmul.mubr.bf16.gmra.mxu0 %v889
    %v939 = vpop.f32.mrf.mxu0
    %v940 = vadd.f32 %v871, %v939
    %v941 = vpop.f32.mrf.mxu0
    %v942 = vpop.f32.mrf.mxu0
    %v943 = vadd.f32 %v871, %v942
    %v944 = vpop.f32.mrf.mxu0
    %945 = vmatprep.mubr.bf16.mxu0 0
    %946 = vmatmul.mubr.bf16.gmra.mxu0 %v892
    %v947 = vpop.f32.mrf.mxu0
    %v948 = vadd.f32 %v871, %v947
    %v949 = vpop.f32.mrf.mxu0
    %v950 = vpop.f32.mrf.mxu0
    %v951 = vadd.f32 %v871, %v950
    %v952 = vpop.f32.mrf.mxu0
    %953 = vmatprep.mubr.bf16.mxu0 0
    %954 = vmatmul.mubr.bf16.gmra.mxu0 %v895
    %v955 = vpop.f32.mrf.mxu0
    %v956 = vadd.f32 %v871, %v955
    %v957 = vpop.f32.mrf.mxu0
    %v958 = vpop.f32.mrf.mxu0
    %v959 = vadd.f32 %v871, %v958
    %v960 = vpop.f32.mrf.mxu0
    %961 = vdwg.mxu0
    %s962 = scalar_lea.vmem %s1, 2
    %v963 = vld [vmem:[%s962] sm:$0x3]
    %s964 = scalar_lea.vmem [#allocation6], 16
    %v965 = vld [vmem:[%s964] sm:$0xf]
    %v966 = vld [vmem:[%s964 + $0x4] sm:$0xf]
    %v967 = vld [vmem:[%s964 + $0x8] sm:$0xf]
    %v968 = vld [vmem:[%s964 + $0xc] sm:$0xf]
    %s969 = scalar_lea.vmem %s4, 1
    %v970 = vld [vmem:[%s969] sm:$0x1]
    %s971 = scalar_lea.vmem [#allocation9], 16
    %v972 = vld [vmem:[%s971] sm:$0xf]
    %v973 = vld [vmem:[%s971 + $0x4] sm:$0xf]
    %v974 = vld [vmem:[%s971 + $0x8] sm:$0xf]
    %v975 = vld [vmem:[%s971 + $0xc] sm:$0xf]
    %s976 = scalar_lea.vmem %s6, 1
    %v977 = vld [vmem:[%s976] sm:$0x1]
    %v979 = vlaneseq
    %v980 = vshrl.u32 %v979, 7
    %v981 = vsub.s32 0, %v980
    %v982 = vrot.slane %v970, %v981
    %v985 = vand.u32 %v963, %v150
    %987 = vmatprep.subr.bf16.mxu0 0
    %988 = vmatpush1.bf16.msra.mxu0 0
    %989 = vmatprep.subr.bf16.mxu0 0
    %990 = vmatpush1.bf16.msra.mxu0 0
    %991 = vmatprep.subr.bf16.mxu0 0
    %992 = vmatpush1.bf16.msra.mxu0 0
    %993 = vmatprep.subr.bf16.mxu0 0
    %994 = vmatpush1.bf16.msra.mxu0 0
    %995 = vmatprep.subr.bf16.mxu0 0
    %996 = vmatpush1.bf16.msra.mxu0 0
    %997 = vmatprep.subr.bf16.mxu0 0
    %998 = vmatpush1.bf16.msra.mxu0 0
    %999 = vmatprep.subr.bf16.mxu0 0
    %1000 = vmatpush1.bf16.msra.mxu0 0
    %1001 = vmatprep.subr.bf16.mxu0 0
    %1002 = vmatpush1.bf16.msra.mxu0 %v985
    %1003 = vmatprep.subr.bf16.mxu0 0
    %1004 = vmatpush2.bf16.msra.mxu0 0
    %1005 = vmatprep.subr.bf16.mxu0 0
    %1006 = vmatpush2.bf16.msra.mxu0 0
    %1007 = vmatprep.subr.bf16.mxu0 0
    %1008 = vmatpush2.bf16.msra.mxu0 0
    %1009 = vmatprep.subr.bf16.mxu0 0
    %1010 = vmatpush2.bf16.msra.mxu0 0
    %1011 = vmatprep.subr.bf16.mxu0 0
    %1012 = vmatpush2.bf16.msra.mxu0 0
    %1013 = vmatprep.subr.bf16.mxu0 0
    %1014 = vmatpush2.bf16.msra.mxu0 0
    %1015 = vmatprep.subr.bf16.mxu0 0
    %1016 = vmatpush2.bf16.msra.mxu0 0
    %1017 = vmatprep.subr.bf16.mxu0 0
    %1018 = vmatpush2.bf16.msra.mxu0 0
    %1019 = vmatprep.mubr.bf16.mxu0 0
    %1020 = vmatmul.mubr.bf16.gmra.mxu0 %v136
    %v1021 = vpop.f32.mrf.mxu0
    %v1022 = vadd.f32 %v982, %v1021
    %v1023 = vpop.f32.mrf.mxu0
    %v1024 = vpop.f32.mrf.mxu0
    %v1025 = vadd.f32 %v982, %v1024
    %v1026 = vpop.f32.mrf.mxu0
    %1027 = vmatprep.mubr.bf16.mxu0 0
    %1028 = vmatmul.mubr.bf16.gmra.mxu0 %v139
    %v1029 = vpop.f32.mrf.mxu0
    %v1030 = vadd.f32 %v982, %v1029
    %v1031 = vpop.f32.mrf.mxu0
    %v1032 = vpop.f32.mrf.mxu0
    %v1033 = vadd.f32 %v982, %v1032
    %v1034 = vpop.f32.mrf.mxu0
    %1035 = vmatprep.mubr.bf16.mxu0 0
    %1036 = vmatmul.mubr.bf16.gmra.mxu0 %v142
    %v1037 = vpop.f32.mrf.mxu0
    %v1038 = vadd.f32 %v982, %v1037
    %v1039 = vpop.f32.mrf.mxu0
    %v1040 = vpop.f32.mrf.mxu0
    %v1041 = vadd.f32 %v982, %v1040
    %v1042 = vpop.f32.mrf.mxu0
    %1043 = vmatprep.mubr.bf16.mxu0 0
    %1044 = vmatmul.mubr.bf16.gmra.mxu0 %v145
    %v1045 = vpop.f32.mrf.mxu0
    %v1046 = vadd.f32 %v982, %v1045
    %v1047 = vpop.f32.mrf.mxu0
    %v1048 = vpop.f32.mrf.mxu0
    %v1049 = vadd.f32 %v982, %v1048
    %v1050 = vpop.f32.mrf.mxu0
    %1051 = vdwg.mxu0
    %s1052 = scalar_lea.vmem %s2, 16
    %v1053 = vld [vmem:[%s1052] sm:$0xf]
    %v1054 = vld [vmem:[%s1052 + $0x4] sm:$0xf]
    %v1055 = vld [vmem:[%s1052 + $0x8] sm:$0xf]
    %v1056 = vld [vmem:[%s1052 + $0xc] sm:$0xf]
    %v1061 = vunpack.c.l.b16 %v1053
    %v1062 = vunpack.c.l.b16 %v1054
    %v1063 = vunpack.c.l.b16 %v1055
    %v1064 = vunpack.c.l.b16 %v1056
    %v1065 = vpack.c.b16 %v1062, %v1061
    %v1066 = vpack.c.b16 %v1064, %v1063
    %1069 = vmatprep.subr.bf16.mxu0 0
    %1070 = vmatpush1.bf16.msra.mxu0 0
    %1071 = vmatprep.subr.bf16.mxu0 0
    %1072 = vmatpush1.bf16.msra.mxu0 0
    %1073 = vmatprep.subr.bf16.mxu0 0
    %1074 = vmatpush1.bf16.msra.mxu0 0
    %1075 = vmatprep.subr.bf16.mxu0 0
    %1076 = vmatpush1.bf16.msra.mxu0 0
    %1077 = vmatprep.subr.bf16.mxu0 0
    %1078 = vmatpush1.bf16.msra.mxu0 0
    %1079 = vmatprep.subr.bf16.mxu0 0
    %1080 = vmatpush1.bf16.msra.mxu0 0
    %1081 = vmatprep.subr.bf16.mxu0 0
    %1082 = vmatpush1.bf16.msra.mxu0 %v1066
    %1083 = vmatprep.subr.bf16.mxu0 0
    %1084 = vmatpush1.bf16.msra.mxu0 %v1065
    %1085 = vmatprep.subr.bf16.mxu0 0
    %1086 = vmatpush2.bf16.msra.mxu0 0
    %1087 = vmatprep.subr.bf16.mxu0 0
    %1088 = vmatpush2.bf16.msra.mxu0 0
    %1089 = vmatprep.subr.bf16.mxu0 0
    %1090 = vmatpush2.bf16.msra.mxu0 0
    %1091 = vmatprep.subr.bf16.mxu0 0
    %1092 = vmatpush2.bf16.msra.mxu0 0
    %1093 = vmatprep.subr.bf16.mxu0 0
    %1094 = vmatpush2.bf16.msra.mxu0 0
    %1095 = vmatprep.subr.bf16.mxu0 0
    %1096 = vmatpush2.bf16.msra.mxu0 0
    %1097 = vmatprep.subr.bf16.mxu0 0
    %1098 = vmatpush2.bf16.msra.mxu0 0
    %1099 = vmatprep.subr.bf16.mxu0 0
    %1100 = vmatpush2.bf16.msra.mxu0 0
    %1101 = vmatprep.mubr.bf16.mxu0 0
    %1102 = vmatmul.mubr.bf16.gmra.mxu0 %v886
    %v1103 = vpop.f32.mrf.mxu0
    %v1104 = vadd.f32 0.0, %v1103
    %v1105 = vpop.f32.mrf.mxu0
    %v1106 = vpop.f32.mrf.mxu0
    %v1107 = vadd.f32 0.0, %v1106
    %v1108 = vpop.f32.mrf.mxu0
    %1109 = vmatprep.mubr.bf16.mxu0 0
    %1110 = vmatmul.mubr.bf16.gmra.mxu0 %v889
    %v1111 = vpop.f32.mrf.mxu0
    %v1112 = vadd.f32 0.0, %v1111
    %v1113 = vpop.f32.mrf.mxu0
    %v1114 = vpop.f32.mrf.mxu0
    %v1115 = vadd.f32 0.0, %v1114
    %v1116 = vpop.f32.mrf.mxu0
    %1117 = vmatprep.mubr.bf16.mxu0 0
    %1118 = vmatmul.mubr.bf16.gmra.mxu0 %v892
    %v1119 = vpop.f32.mrf.mxu0
    %v1120 = vadd.f32 0.0, %v1119
    %v1121 = vpop.f32.mrf.mxu0
    %v1122 = vpop.f32.mrf.mxu0
    %v1123 = vadd.f32 0.0, %v1122
    %v1124 = vpop.f32.mrf.mxu0
    %1125 = vmatprep.mubr.bf16.mxu0 0
    %1126 = vmatmul.mubr.bf16.gmra.mxu0 %v895
    %v1127 = vpop.f32.mrf.mxu0
    %v1128 = vadd.f32 0.0, %v1127
    %v1129 = vpop.f32.mrf.mxu0
    %v1130 = vpop.f32.mrf.mxu0
    %v1131 = vadd.f32 0.0, %v1130
    %v1132 = vpop.f32.mrf.mxu0
    %1133 = vdwg.mxu0
    %v1134 = vadd.f32 %v1022, %v1104
    %v1135 = vadd.f32 %v1025, %v1107
    %v1136 = vadd.f32 %v1030, %v1112
    %v1137 = vadd.f32 %v1033, %v1115
    %v1138 = vadd.f32 %v1038, %v1120
    %v1139 = vadd.f32 %v1041, %v1123
    %v1140 = vadd.f32 %v1046, %v1128
    %v1141 = vadd.f32 %v1049, %v1131
    %1142 = vst [vmem:[#allocation2] sm:$0xff] %v1134
    %1143 = vst [vmem:[#allocation2 + $0x8] sm:$0xff] %v1135
    %1144 = vst [vmem:[#allocation2 + $0x10] sm:$0xff] %v1136
    %1145 = vst [vmem:[#allocation2 + $0x18] sm:$0xff] %v1137
    %1146 = vst [vmem:[#allocation2 + $0x20] sm:$0xff] %v1138
    %1147 = vst [vmem:[#allocation2 + $0x28] sm:$0xff] %v1139
    %1148 = vst [vmem:[#allocation2 + $0x30] sm:$0xff] %v1140
    %1149 = vst [vmem:[#allocation2 + $0x38] sm:$0xff] %v1141
    %s1150 = scalar_lea.vmem [#allocation4], 8
    %v1151 = vld [vmem:[%s1150] sm:$0xff]
    %s1152 = scalar_lea.vmem [#allocation5], 8
    %v1153 = vld [vmem:[%s1152] sm:$0xff]
    %v1154 = vld [vmem:[#allocation2] sm:$0xff]
    %v1155 = vpack.c.bf16 %v1151, %v1151
    %v1160 = vunpack.c.l.b16 %v965
    %v1161 = vunpack.c.l.b16 %v966
    %v1162 = vunpack.c.l.b16 %v967
    %v1163 = vunpack.c.l.b16 %v968
    %v1164 = vpack.c.b16 %v1161, %v1160
    %v1165 = vpack.c.b16 %v1163, %v1162
    %v1169 = vsel %vm243, %v1155, 0
    %1171 = vmatprep.subr.bf16.mxu0 0
    %1172 = vmatpush1.bf16.msra.mxu0 0
    %1173 = vmatprep.subr.bf16.mxu0 0
    %1174 = vmatpush1.bf16.msra.mxu0 0
    %1175 = vmatprep.subr.bf16.mxu0 0
    %1176 = vmatpush1.bf16.msra.mxu0 0
    %1177 = vmatprep.subr.bf16.mxu0 0
    %1178 = vmatpush1.bf16.msra.mxu0 0
    %1179 = vmatprep.subr.bf16.mxu0 0
    %1180 = vmatpush1.bf16.msra.mxu0 0
    %1181 = vmatprep.subr.bf16.mxu0 0
    %1182 = vmatpush1.bf16.msra.mxu0 0
    %1183 = vmatprep.subr.bf16.mxu0 0
    %1184 = vmatpush1.bf16.msra.mxu0 %v1165
    %1185 = vmatprep.subr.bf16.mxu0 0
    %1186 = vmatpush1.bf16.msra.mxu0 %v1164
    %1187 = vmatprep.subr.bf16.mxu0 0
    %1188 = vmatpush2.bf16.msra.mxu0 0
    %1189 = vmatprep.subr.bf16.mxu0 0
    %1190 = vmatpush2.bf16.msra.mxu0 0
    %1191 = vmatprep.subr.bf16.mxu0 0
    %1192 = vmatpush2.bf16.msra.mxu0 0
    %1193 = vmatprep.subr.bf16.mxu0 0
    %1194 = vmatpush2.bf16.msra.mxu0 0
    %1195 = vmatprep.subr.bf16.mxu0 0
    %1196 = vmatpush2.bf16.msra.mxu0 0
    %1197 = vmatprep.subr.bf16.mxu0 0
    %1198 = vmatpush2.bf16.msra.mxu0 0
    %1199 = vmatprep.subr.bf16.mxu0 0
    %1200 = vmatpush2.bf16.msra.mxu0 0
    %1201 = vmatprep.subr.bf16.mxu0 0
    %1202 = vmatpush2.bf16.msra.mxu0 0
    %1203 = vmatprep.mubr.bf16.mxu0 0
    %1204 = vmatmul.mubr.bf16.gmra.mxu0 %v1169
    %v1205 = vpop.f32.mrf.mxu0
    %v1206 = vadd.f32 0.0, %v1205
    %v1207 = vpop.f32.mrf.mxu0
    %v1208 = vpop.f32.mrf.mxu0
    %v1209 = vpop.f32.mrf.mxu0
    %1210 = vdwg.mxu0
    %v1211 = vadd.f32 %v1154, %v1206
    %v1212 = vtanh.pop %v1211
    %v1213 = vmul.f32 %v1212, 0.5
    %v1214 = vadd.f32 %v1213, 0.5
    %1216 = vrot.lane.b32.xlu0 %v1153, 32
    %v1217 = vpop.permute.xlu0 %1216
    %v1219 = vmul.f32 %v1214, %v1217
    %1221 = vrot.lane.b32.xlu0 %v1212, 64
    %v1222 = vpop.permute.xlu0 %1221
    %v1224 = vmul.f32 %v1214, %v1222
    %1226 = vrot.lane.b32.xlu0 %v1224, 32
    %v1227 = vpop.permute.xlu0 %1226
    %v1229 = vadd.f32 %v1219, %v1227
    %v1230 = vtanh.pop %v1229
    %1232 = vrot.lane.b32.xlu0 %v1230, 64
    %v1233 = vpop.permute.xlu0 %1232
    %v1235 = vmul.f32 %v1214, %v1233
    %1237 = vrot.lane.b32.xlu0 %v1235, 32
    %v1238 = vpop.permute.xlu0 %1237
    %1240 = vst.msk [vmem:[#allocation3] sm:$0xff] %vm243, %v1238
    %v1241 = vld [vmem:[%s317] sm:$0xff]
    %v1242 = vpack.c.bf16 %v1235, %v1235
    %1244 = vrot.lane.b32.xlu0 %v1242, 32
    %v1245 = vpop.permute.xlu0 %1244
    %v1247 = vsel %vm243, %v1245, 0
    %1249 = vmatprep.subr.bf16.mxu0 0
    %1250 = vmatpush1.bf16.msra.mxu0 0
    %1251 = vmatprep.subr.bf16.mxu0 0
    %1252 = vmatpush1.bf16.msra.mxu0 0
    %1253 = vmatprep.subr.bf16.mxu0 0
    %1254 = vmatpush1.bf16.msra.mxu0 0
    %1255 = vmatprep.subr.bf16.mxu0 0
    %1256 = vmatpush1.bf16.msra.mxu0 0
    %1257 = vmatprep.subr.bf16.mxu0 0
    %1258 = vmatpush1.bf16.msra.mxu0 0
    %1259 = vmatprep.subr.bf16.mxu0 0
    %1260 = vmatpush1.bf16.msra.mxu0 0
    %1261 = vmatprep.subr.bf16.mxu0 0
    %1262 = vmatpush1.bf16.msra.mxu0 %v1165
    %1263 = vmatprep.subr.bf16.mxu0 0
    %1264 = vmatpush1.bf16.msra.mxu0 %v1164
    %1265 = vmatprep.subr.bf16.mxu0 0
    %1266 = vmatpush2.bf16.msra.mxu0 0
    %1267 = vmatprep.subr.bf16.mxu0 0
    %1268 = vmatpush2.bf16.msra.mxu0 0
    %1269 = vmatprep.subr.bf16.mxu0 0
    %1270 = vmatpush2.bf16.msra.mxu0 0
    %1271 = vmatprep.subr.bf16.mxu0 0
    %1272 = vmatpush2.bf16.msra.mxu0 0
    %1273 = vmatprep.subr.bf16.mxu0 0
    %1274 = vmatpush2.bf16.msra.mxu0 0
    %1275 = vmatprep.subr.bf16.mxu0 0
    %1276 = vmatpush2.bf16.msra.mxu0 0
    %1277 = vmatprep.subr.bf16.mxu0 0
    %1278 = vmatpush2.bf16.msra.mxu0 0
    %1279 = vmatprep.subr.bf16.mxu0 0
    %1280 = vmatpush2.bf16.msra.mxu0 0
    %1281 = vmatprep.mubr.bf16.mxu0 0
    %1282 = vmatmul.mubr.bf16.gmra.mxu0 %v1247
    %v1283 = vpop.f32.mrf.mxu0
    %v1284 = vadd.f32 0.0, %v1283
    %v1285 = vpop.f32.mrf.mxu0
    %v1286 = vpop.f32.mrf.mxu0
    %v1287 = vpop.f32.mrf.mxu0
    %1288 = vdwg.mxu0
    %v1289 = vadd.f32 %v1241, %v1284
    %v1290 = vtanh.pop %v1289
    %v1291 = vmul.f32 %v1290, 0.5
    %v1292 = vadd.f32 %v1291, 0.5
    %v1293 = vmul.f32 %v1292, %v1229
    %1295 = vrot.lane.b32.xlu0 %v1290, 64
    %v1296 = vpop.permute.xlu0 %1295
    %v1298 = vmul.f32 %v1292, %v1296
    %1300 = vrot.lane.b32.xlu0 %v1298, 32
    %v1301 = vpop.permute.xlu0 %1300
    %v1303 = vadd.f32 %v1293, %v1301
    %v1304 = vtanh.pop %v1303
    %1306 = vrot.lane.b32.xlu0 %v1304, 64
    %v1307 = vpop.permute.xlu0 %1306
    %v1309 = vmul.f32 %v1292, %v1307
    %1311 = vrot.lane.b32.xlu0 %v1309, 32
    %v1312 = vpop.permute.xlu0 %1311
    %1314 = vst.msk [vmem:[%s391] sm:$0xff] %vm243, %v1312
    %v1315 = vld [vmem:[%s393] sm:$0xff]
    %v1316 = vpack.c.bf16 %v1309, %v1309
    %1318 = vrot.lane.b32.xlu0 %v1316, 32
    %v1319 = vpop.permute.xlu0 %1318
    %v1321 = vsel %vm243, %v1319, 0
    %1323 = vmatprep.subr.bf16.mxu0 0
    %1324 = vmatpush1.bf16.msra.mxu0 0
    %1325 = vmatprep.subr.bf16.mxu0 0
    %1326 = vmatpush1.bf16.msra.mxu0 0
    %1327 = vmatprep.subr.bf16.mxu0 0
    %1328 = vmatpush1.bf16.msra.mxu0 0
    %1329 = vmatprep.subr.bf16.mxu0 0
    %1330 = vmatpush1.bf16.msra.mxu0 0
    %1331 = vmatprep.subr.bf16.mxu0 0
    %1332 = vmatpush1.bf16.msra.mxu0 0
    %1333 = vmatprep.subr.bf16.mxu0 0
    %1334 = vmatpush1.bf16.msra.mxu0 0
    %1335 = vmatprep.subr.bf16.mxu0 0
    %1336 = vmatpush1.bf16.msra.mxu0 %v1165
    %1337 = vmatprep.subr.bf16.mxu0 0
    %1338 = vmatpush1.bf16.msra.mxu0 %v1164
    %1339 = vmatprep.subr.bf16.mxu0 0
    %1340 = vmatpush2.bf16.msra.mxu0 0
    %1341 = vmatprep.subr.bf16.mxu0 0
    %1342 = vmatpush2.bf16.msra.mxu0 0
    %1343 = vmatprep.subr.bf16.mxu0 0
    %1344 = vmatpush2.bf16.msra.mxu0 0
    %1345 = vmatprep.subr.bf16.mxu0 0
    %1346 = vmatpush2.bf16.msra.mxu0 0
    %1347 = vmatprep.subr.bf16.mxu0 0
    %1348 = vmatpush2.bf16.msra.mxu0 0
    %1349 = vmatprep.subr.bf16.mxu0 0
    %1350 = vmatpush2.bf16.msra.mxu0 0
    %1351 = vmatprep.subr.bf16.mxu0 0
    %1352 = vmatpush2.bf16.msra.mxu0 0
    %1353 = vmatprep.subr.bf16.mxu0 0
    %1354 = vmatpush2.bf16.msra.mxu0 0
    %1355 = vmatprep.mubr.bf16.mxu0 0
    %1356 = vmatmul.mubr.bf16.gmra.mxu0 %v1321
    %v1357 = vpop.f32.mrf.mxu0
    %v1358 = vadd.f32 0.0, %v1357
    %v1359 = vpop.f32.mrf.mxu0
    %v1360 = vpop.f32.mrf.mxu0
    %v1361 = vpop.f32.mrf.mxu0
    %1362 = vdwg.mxu0
    %v1363 = vadd.f32 %v1315, %v1358
    %v1364 = vtanh.pop %v1363
    %v1365 = vmul.f32 %v1364, 0.5
    %v1366 = vadd.f32 %v1365, 0.5
    %v1367 = vmul.f32 %v1366, %v1303
    %1369 = vrot.lane.b32.xlu0 %v1364, 64
    %v1370 = vpop.permute.xlu0 %1369
    %v1372 = vmul.f32 %v1366, %v1370
    %1374 = vrot.lane.b32.xlu0 %v1372, 32
    %v1375 = vpop.permute.xlu0 %1374
    %v1377 = vadd.f32 %v1367, %v1375
    %v1378 = vtanh.pop %v1377
    %1380 = vrot.lane.b32.xlu0 %v1378, 64
    %v1381 = vpop.permute.xlu0 %1380
    %v1383 = vmul.f32 %v1366, %v1381
    %1385 = vrot.lane.b32.xlu0 %v1383, 32
    %v1386 = vpop.permute.xlu0 %1385
    %1388 = vst.msk [vmem:[%s467] sm:$0xff] %vm243, %v1386
    %v1389 = vld [vmem:[%s469] sm:$0xff]
    %v1390 = vpack.c.bf16 %v1383, %v1383
    %1392 = vrot.lane.b32.xlu0 %v1390, 32
    %v1393 = vpop.permute.xlu0 %1392
    %v1395 = vsel %vm243, %v1393, 0
    %1397 = vmatprep.subr.bf16.mxu0 0
    %1398 = vmatpush1.bf16.msra.mxu0 0
    %1399 = vmatprep.subr.bf16.mxu0 0
    %1400 = vmatpush1.bf16.msra.mxu0 0
    %1401 = vmatprep.subr.bf16.mxu0 0
    %1402 = vmatpush1.bf16.msra.mxu0 0
    %1403 = vmatprep.subr.bf16.mxu0 0
    %1404 = vmatpush1.bf16.msra.mxu0 0
    %1405 = vmatprep.subr.bf16.mxu0 0
    %1406 = vmatpush1.bf16.msra.mxu0 0
    %1407 = vmatprep.subr.bf16.mxu0 0
    %1408 = vmatpush1.bf16.msra.mxu0 0
    %1409 = vmatprep.subr.bf16.mxu0 0
    %1410 = vmatpush1.bf16.msra.mxu0 %v1165
    %1411 = vmatprep.subr.bf16.mxu0 0
    %1412 = vmatpush1.bf16.msra.mxu0 %v1164
    %1413 = vmatprep.subr.bf16.mxu0 0
    %1414 = vmatpush2.bf16.msra.mxu0 0
    %1415 = vmatprep.subr.bf16.mxu0 0
    %1416 = vmatpush2.bf16.msra.mxu0 0
    %1417 = vmatprep.subr.bf16.mxu0 0
    %1418 = vmatpush2.bf16.msra.mxu0 0
    %1419 = vmatprep.subr.bf16.mxu0 0
    %1420 = vmatpush2.bf16.msra.mxu0 0
    %1421 = vmatprep.subr.bf16.mxu0 0
    %1422 = vmatpush2.bf16.msra.mxu0 0
    %1423 = vmatprep.subr.bf16.mxu0 0
    %1424 = vmatpush2.bf16.msra.mxu0 0
    %1425 = vmatprep.subr.bf16.mxu0 0
    %1426 = vmatpush2.bf16.msra.mxu0 0
    %1427 = vmatprep.subr.bf16.mxu0 0
    %1428 = vmatpush2.bf16.msra.mxu0 0
    %1429 = vmatprep.mubr.bf16.mxu0 0
    %1430 = vmatmul.mubr.bf16.gmra.mxu0 %v1395
    %v1431 = vpop.f32.mrf.mxu0
    %v1432 = vadd.f32 0.0, %v1431
    %v1433 = vpop.f32.mrf.mxu0
    %v1434 = vpop.f32.mrf.mxu0
    %v1435 = vpop.f32.mrf.mxu0
    %1436 = vdwg.mxu0
    %v1437 = vadd.f32 %v1389, %v1432
    %v1438 = vtanh.pop %v1437
    %v1439 = vmul.f32 %v1438, 0.5
    %v1440 = vadd.f32 %v1439, 0.5
    %v1441 = vmul.f32 %v1440, %v1377
    %1443 = vrot.lane.b32.xlu0 %v1438, 64
    %v1444 = vpop.permute.xlu0 %1443
    %v1446 = vmul.f32 %v1440, %v1444
    %1448 = vrot.lane.b32.xlu0 %v1446, 32
    %v1449 = vpop.permute.xlu0 %1448
    %v1451 = vadd.f32 %v1441, %v1449
    %v1452 = vtanh.pop %v1451
    %1454 = vrot.lane.b32.xlu0 %v1452, 64
    %v1455 = vpop.permute.xlu0 %1454
    %v1457 = vmul.f32 %v1440, %v1455
    %1459 = vrot.lane.b32.xlu0 %v1457, 32
    %v1460 = vpop.permute.xlu0 %1459
    %1462 = vst.msk [vmem:[%s543] sm:$0xff] %vm243, %v1460
    %v1463 = vld [vmem:[%s545] sm:$0xff]
    %v1464 = vpack.c.bf16 %v1457, %v1457
    %1466 = vrot.lane.b32.xlu0 %v1464, 32
    %v1467 = vpop.permute.xlu0 %1466
    %v1469 = vsel %vm243, %v1467, 0
    %1471 = vmatprep.subr.bf16.mxu0 0
    %1472 = vmatpush1.bf16.msra.mxu0 0
    %1473 = vmatprep.subr.bf16.mxu0 0
    %1474 = vmatpush1.bf16.msra.mxu0 0
    %1475 = vmatprep.subr.bf16.mxu0 0
    %1476 = vmatpush1.bf16.msra.mxu0 0
    %1477 = vmatprep.subr.bf16.mxu0 0
    %1478 = vmatpush1.bf16.msra.mxu0 0
    %1479 = vmatprep.subr.bf16.mxu0 0
    %1480 = vmatpush1.bf16.msra.mxu0 0
    %1481 = vmatprep.subr.bf16.mxu0 0
    %1482 = vmatpush1.bf16.msra.mxu0 0
    %1483 = vmatprep.subr.bf16.mxu0 0
    %1484 = vmatpush1.bf16.msra.mxu0 %v1165
    %1485 = vmatprep.subr.bf16.mxu0 0
    %1486 = vmatpush1.bf16.msra.mxu0 %v1164
    %1487 = vmatprep.subr.bf16.mxu0 0
    %1488 = vmatpush2.bf16.msra.mxu0 0
    %1489 = vmatprep.subr.bf16.mxu0 0
    %1490 = vmatpush2.bf16.msra.mxu0 0
    %1491 = vmatprep.subr.bf16.mxu0 0
    %1492 = vmatpush2.bf16.msra.mxu0 0
    %1493 = vmatprep.subr.bf16.mxu0 0
    %1494 = vmatpush2.bf16.msra.mxu0 0
    %1495 = vmatprep.subr.bf16.mxu0 0
    %1496 = vmatpush2.bf16.msra.mxu0 0
    %1497 = vmatprep.subr.bf16.mxu0 0
    %1498 = vmatpush2.bf16.msra.mxu0 0
    %1499 = vmatprep.subr.bf16.mxu0 0
    %1500 = vmatpush2.bf16.msra.mxu0 0
    %1501 = vmatprep.subr.bf16.mxu0 0
    %1502 = vmatpush2.bf16.msra.mxu0 0
    %1503 = vmatprep.mubr.bf16.mxu0 0
    %1504 = vmatmul.mubr.bf16.gmra.mxu0 %v1469
    %v1505 = vpop.f32.mrf.mxu0
    %v1506 = vadd.f32 0.0, %v1505
    %v1507 = vpop.f32.mrf.mxu0
    %v1508 = vpop.f32.mrf.mxu0
    %v1509 = vpop.f32.mrf.mxu0
    %1510 = vdwg.mxu0
    %v1511 = vadd.f32 %v1463, %v1506
    %v1512 = vtanh.pop %v1511
    %v1513 = vmul.f32 %v1512, 0.5
    %v1514 = vadd.f32 %v1513, 0.5
    %v1515 = vmul.f32 %v1514, %v1451
    %1517 = vrot.lane.b32.xlu0 %v1512, 64
    %v1518 = vpop.permute.xlu0 %1517
    %v1520 = vmul.f32 %v1514, %v1518
    %1522 = vrot.lane.b32.xlu0 %v1520, 32
    %v1523 = vpop.permute.xlu0 %1522
    %v1525 = vadd.f32 %v1515, %v1523
    %v1526 = vtanh.pop %v1525
    %1528 = vrot.lane.b32.xlu0 %v1526, 64
    %v1529 = vpop.permute.xlu0 %1528
    %v1531 = vmul.f32 %v1514, %v1529
    %1533 = vrot.lane.b32.xlu0 %v1531, 32
    %v1534 = vpop.permute.xlu0 %1533
    %1536 = vst.msk [vmem:[%s619] sm:$0xff] %vm243, %v1534
    %v1537 = vld [vmem:[%s621] sm:$0xff]
    %v1538 = vpack.c.bf16 %v1531, %v1531
    %1540 = vrot.lane.b32.xlu0 %v1538, 32
    %v1541 = vpop.permute.xlu0 %1540
    %v1543 = vsel %vm243, %v1541, 0
    %1545 = vmatprep.subr.bf16.mxu0 0
    %1546 = vmatpush1.bf16.msra.mxu0 0
    %1547 = vmatprep.subr.bf16.mxu0 0
    %1548 = vmatpush1.bf16.msra.mxu0 0
    %1549 = vmatprep.subr.bf16.mxu0 0
    %1550 = vmatpush1.bf16.msra.mxu0 0
    %1551 = vmatprep.subr.bf16.mxu0 0
    %1552 = vmatpush1.bf16.msra.mxu0 0
    %1553 = vmatprep.subr.bf16.mxu0 0
    %1554 = vmatpush1.bf16.msra.mxu0 0
    %1555 = vmatprep.subr.bf16.mxu0 0
    %1556 = vmatpush1.bf16.msra.mxu0 0
    %1557 = vmatprep.subr.bf16.mxu0 0
    %1558 = vmatpush1.bf16.msra.mxu0 %v1165
    %1559 = vmatprep.subr.bf16.mxu0 0
    %1560 = vmatpush1.bf16.msra.mxu0 %v1164
    %1561 = vmatprep.subr.bf16.mxu0 0
    %1562 = vmatpush2.bf16.msra.mxu0 0
    %1563 = vmatprep.subr.bf16.mxu0 0
    %1564 = vmatpush2.bf16.msra.mxu0 0
    %1565 = vmatprep.subr.bf16.mxu0 0
    %1566 = vmatpush2.bf16.msra.mxu0 0
    %1567 = vmatprep.subr.bf16.mxu0 0
    %1568 = vmatpush2.bf16.msra.mxu0 0
    %1569 = vmatprep.subr.bf16.mxu0 0
    %1570 = vmatpush2.bf16.msra.mxu0 0
    %1571 = vmatprep.subr.bf16.mxu0 0
    %1572 = vmatpush2.bf16.msra.mxu0 0
    %1573 = vmatprep.subr.bf16.mxu0 0
    %1574 = vmatpush2.bf16.msra.mxu0 0
    %1575 = vmatprep.subr.bf16.mxu0 0
    %1576 = vmatpush2.bf16.msra.mxu0 0
    %1577 = vmatprep.mubr.bf16.mxu0 0
    %1578 = vmatmul.mubr.bf16.gmra.mxu0 %v1543
    %v1579 = vpop.f32.mrf.mxu0
    %v1580 = vadd.f32 0.0, %v1579
    %v1581 = vpop.f32.mrf.mxu0
    %v1582 = vpop.f32.mrf.mxu0
    %v1583 = vpop.f32.mrf.mxu0
    %1584 = vdwg.mxu0
    %v1585 = vadd.f32 %v1537, %v1580
    %v1586 = vtanh.pop %v1585
    %v1587 = vmul.f32 %v1586, 0.5
    %v1588 = vadd.f32 %v1587, 0.5
    %v1589 = vmul.f32 %v1588, %v1525
    %1591 = vrot.lane.b32.xlu0 %v1586, 64
    %v1592 = vpop.permute.xlu0 %1591
    %v1594 = vmul.f32 %v1588, %v1592
    %1596 = vrot.lane.b32.xlu0 %v1594, 32
    %v1597 = vpop.permute.xlu0 %1596
    %v1599 = vadd.f32 %v1589, %v1597
    %v1600 = vtanh.pop %v1599
    %1602 = vrot.lane.b32.xlu0 %v1600, 64
    %v1603 = vpop.permute.xlu0 %1602
    %v1605 = vmul.f32 %v1588, %v1603
    %1607 = vrot.lane.b32.xlu0 %v1605, 32
    %v1608 = vpop.permute.xlu0 %1607
    %1610 = vst.msk [vmem:[%s695] sm:$0xff] %vm243, %v1608
    %v1611 = vld [vmem:[%s697] sm:$0xff]
    %v1612 = vpack.c.bf16 %v1605, %v1605
    %1614 = vrot.lane.b32.xlu0 %v1612, 32
    %v1615 = vpop.permute.xlu0 %1614
    %v1617 = vsel %vm243, %v1615, 0
    %1619 = vmatprep.subr.bf16.mxu0 0
    %1620 = vmatpush1.bf16.msra.mxu0 0
    %1621 = vmatprep.subr.bf16.mxu0 0
    %1622 = vmatpush1.bf16.msra.mxu0 0
    %1623 = vmatprep.subr.bf16.mxu0 0
    %1624 = vmatpush1.bf16.msra.mxu0 0
    %1625 = vmatprep.subr.bf16.mxu0 0
    %1626 = vmatpush1.bf16.msra.mxu0 0
    %1627 = vmatprep.subr.bf16.mxu0 0
    %1628 = vmatpush1.bf16.msra.mxu0 0
    %1629 = vmatprep.subr.bf16.mxu0 0
    %1630 = vmatpush1.bf16.msra.mxu0 0
    %1631 = vmatprep.subr.bf16.mxu0 0
    %1632 = vmatpush1.bf16.msra.mxu0 %v1165
    %1633 = vmatprep.subr.bf16.mxu0 0
    %1634 = vmatpush1.bf16.msra.mxu0 %v1164
    %1635 = vmatprep.subr.bf16.mxu0 0
    %1636 = vmatpush2.bf16.msra.mxu0 0
    %1637 = vmatprep.subr.bf16.mxu0 0
    %1638 = vmatpush2.bf16.msra.mxu0 0
    %1639 = vmatprep.subr.bf16.mxu0 0
    %1640 = vmatpush2.bf16.msra.mxu0 0
    %1641 = vmatprep.subr.bf16.mxu0 0
    %1642 = vmatpush2.bf16.msra.mxu0 0
    %1643 = vmatprep.subr.bf16.mxu0 0
    %1644 = vmatpush2.bf16.msra.mxu0 0
    %1645 = vmatprep.subr.bf16.mxu0 0
    %1646 = vmatpush2.bf16.msra.mxu0 0
    %1647 = vmatprep.subr.bf16.mxu0 0
    %1648 = vmatpush2.bf16.msra.mxu0 0
    %1649 = vmatprep.subr.bf16.mxu0 0
    %1650 = vmatpush2.bf16.msra.mxu0 0
    %1651 = vmatprep.mubr.bf16.mxu0 0
    %1652 = vmatmul.mubr.bf16.gmra.mxu0 %v1617
    %v1653 = vpop.f32.mrf.mxu0
    %v1654 = vadd.f32 0.0, %v1653
    %v1655 = vpop.f32.mrf.mxu0
    %v1656 = vpop.f32.mrf.mxu0
    %v1657 = vpop.f32.mrf.mxu0
    %1658 = vdwg.mxu0
    %v1659 = vadd.f32 %v1611, %v1654
    %v1660 = vtanh.pop %v1659
    %v1661 = vmul.f32 %v1660, 0.5
    %v1662 = vadd.f32 %v1661, 0.5
    %v1663 = vmul.f32 %v1662, %v1599
    %1665 = vrot.lane.b32.xlu0 %v1660, 64
    %v1666 = vpop.permute.xlu0 %1665
    %v1668 = vmul.f32 %v1662, %v1666
    %1670 = vrot.lane.b32.xlu0 %v1668, 32
    %v1671 = vpop.permute.xlu0 %1670
    %v1673 = vadd.f32 %v1663, %v1671
    %v1674 = vtanh.pop %v1673
    %1676 = vrot.lane.b32.xlu0 %v1674, 64
    %v1677 = vpop.permute.xlu0 %1676
    %v1679 = vmul.f32 %v1662, %v1677
    %1681 = vrot.lane.b32.xlu0 %v1679, 32
    %v1682 = vpop.permute.xlu0 %1681
    %1684 = vst.msk [vmem:[%s771] sm:$0xff] %vm243, %v1682
    %v1685 = vld [vmem:[%s773] sm:$0xff]
    %v1686 = vpack.c.bf16 %v1679, %v1679
    %1688 = vrot.lane.b32.xlu0 %v1686, 32
    %v1689 = vpop.permute.xlu0 %1688
    %v1691 = vsel %vm243, %v1689, 0
    %1693 = vmatprep.subr.bf16.mxu0 0
    %1694 = vmatpush1.bf16.msra.mxu0 0
    %1695 = vmatprep.subr.bf16.mxu0 0
    %1696 = vmatpush1.bf16.msra.mxu0 0
    %1697 = vmatprep.subr.bf16.mxu0 0
    %1698 = vmatpush1.bf16.msra.mxu0 0
    %1699 = vmatprep.subr.bf16.mxu0 0
    %1700 = vmatpush1.bf16.msra.mxu0 0
    %1701 = vmatprep.subr.bf16.mxu0 0
    %1702 = vmatpush1.bf16.msra.mxu0 0
    %1703 = vmatprep.subr.bf16.mxu0 0
    %1704 = vmatpush1.bf16.msra.mxu0 0
    %1705 = vmatprep.subr.bf16.mxu0 0
    %1706 = vmatpush1.bf16.msra.mxu0 %v1165
    %1707 = vmatprep.subr.bf16.mxu0 0
    %1708 = vmatpush1.bf16.msra.mxu0 %v1164
    %1709 = vmatprep.subr.bf16.mxu0 0
    %1710 = vmatpush2.bf16.msra.mxu0 0
    %1711 = vmatprep.subr.bf16.mxu0 0
    %1712 = vmatpush2.bf16.msra.mxu0 0
    %1713 = vmatprep.subr.bf16.mxu0 0
    %1714 = vmatpush2.bf16.msra.mxu0 0
    %1715 = vmatprep.subr.bf16.mxu0 0
    %1716 = vmatpush2.bf16.msra.mxu0 0
    %1717 = vmatprep.subr.bf16.mxu0 0
    %1718 = vmatpush2.bf16.msra.mxu0 0
    %1719 = vmatprep.subr.bf16.mxu0 0
    %1720 = vmatpush2.bf16.msra.mxu0 0
    %1721 = vmatprep.subr.bf16.mxu0 0
    %1722 = vmatpush2.bf16.msra.mxu0 0
    %1723 = vmatprep.subr.bf16.mxu0 0
    %1724 = vmatpush2.bf16.msra.mxu0 0
    %1725 = vmatprep.mubr.bf16.mxu0 0
    %1726 = vmatmul.mubr.bf16.gmra.mxu0 %v1691
    %v1727 = vpop.f32.mrf.mxu0
    %v1728 = vadd.f32 0.0, %v1727
    %v1729 = vpop.f32.mrf.mxu0
    %v1730 = vpop.f32.mrf.mxu0
    %v1731 = vpop.f32.mrf.mxu0
    %1732 = vdwg.mxu0
    %v1733 = vadd.f32 %v1685, %v1728
    %v1734 = vtanh.pop %v1733
    %v1735 = vmul.f32 %v1734, 0.5
    %v1736 = vadd.f32 %v1735, 0.5
    %v1737 = vmul.f32 %v1736, %v1673
    %1739 = vrot.lane.b32.xlu0 %v1734, 64
    %v1740 = vpop.permute.xlu0 %1739
    %v1742 = vmul.f32 %v1736, %v1740
    %1744 = vrot.lane.b32.xlu0 %v1742, 32
    %v1745 = vpop.permute.xlu0 %1744
    %v1747 = vadd.f32 %v1737, %v1745
    %v1748 = vtanh.pop %v1747
    %1750 = vrot.lane.b32.xlu0 %v1748, 64
    %v1751 = vpop.permute.xlu0 %1750
    %v1753 = vmul.f32 %v1736, %v1751
    %1755 = vrot.lane.b32.xlu0 %v1753, 32
    %v1756 = vpop.permute.xlu0 %1755
    %1758 = vst.msk [vmem:[%s847] sm:$0xff] %vm243, %v1756
    %1759 = vst.msk [vmem:[%s1150] sm:$0xff] %vm243, %v1756
    %1761 = vrot.lane.b32.xlu0 %v1747, 96
    %v1762 = vpop.permute.xlu0 %1761
    %1764 = vst.msk [vmem:[%s1152] sm:$0xff] %vm243, %v1762
    %v1765 = vld [vmem:[#allocation3] sm:$0xff]
    %v1766 = vld [vmem:[#allocation3 + $0x8] sm:$0xff]
    %v1767 = vld [vmem:[#allocation3 + $0x10] sm:$0xff]
    %v1768 = vld [vmem:[#allocation3 + $0x18] sm:$0xff]
    %v1769 = vld [vmem:[#allocation3 + $0x20] sm:$0xff]
    %v1770 = vld [vmem:[#allocation3 + $0x28] sm:$0xff]
    %v1771 = vld [vmem:[#allocation3 + $0x30] sm:$0xff]
    %v1772 = vld [vmem:[#allocation3 + $0x38] sm:$0xff]
    %v1773 = vpack.c.bf16 %v1766, %v1765
    %v1774 = vpack.c.bf16 %v1768, %v1767
    %v1775 = vpack.c.bf16 %v1770, %v1769
    %v1776 = vpack.c.bf16 %v1772, %v1771
    %v1778 = vlaneseq
    %v1779 = vshrl.u32 %v1778, 7
    %v1780 = vsub.s32 0, %v1779
    %v1781 = vrot.slane %v977, %v1780
    %v1787 = vunpack.c.l.b16 %v972
    %v1788 = vunpack.c.l.b16 %v973
    %v1789 = vunpack.c.l.b16 %v974
    %v1790 = vunpack.c.l.b16 %v975
    %v1791 = vpack.c.b16 %v1788, %v1787
    %v1792 = vpack.c.b16 %v1790, %v1789
    %v1796 = vsel %vm243, %v1773, 0
    %v1799 = vsel %vm243, %v1774, 0
    %v1802 = vsel %vm243, %v1775, 0
    %v1805 = vsel %vm243, %v1776, 0
    %1807 = vmatprep.subr.bf16.mxu0 0
    %1808 = vmatpush1.bf16.msra.mxu0 0
    %1809 = vmatprep.subr.bf16.mxu0 0
    %1810 = vmatpush1.bf16.msra.mxu0 0
    %1811 = vmatprep.subr.bf16.mxu0 0
    %1812 = vmatpush1.bf16.msra.mxu0 0
    %1813 = vmatprep.subr.bf16.mxu0 0
    %1814 = vmatpush1.bf16.msra.mxu0 0
    %1815 = vmatprep.subr.bf16.mxu0 0
    %1816 = vmatpush1.bf16.msra.mxu0 0
    %1817 = vmatprep.subr.bf16.mxu0 0
    %1818 = vmatpush1.bf16.msra.mxu0 0
    %1819 = vmatprep.subr.bf16.mxu0 0
    %1820 = vmatpush1.bf16.msra.mxu0 %v1792
    %1821 = vmatprep.subr.bf16.mxu0 0
    %1822 = vmatpush1.bf16.msra.mxu0 %v1791
    %1823 = vmatprep.subr.bf16.mxu0 0
    %1824 = vmatpush2.bf16.msra.mxu0 0
    %1825 = vmatprep.subr.bf16.mxu0 0
    %1826 = vmatpush2.bf16.msra.mxu0 0
    %1827 = vmatprep.subr.bf16.mxu0 0
    %1828 = vmatpush2.bf16.msra.mxu0 0
    %1829 = vmatprep.subr.bf16.mxu0 0
    %1830 = vmatpush2.bf16.msra.mxu0 0
    %1831 = vmatprep.subr.bf16.mxu0 0
    %1832 = vmatpush2.bf16.msra.mxu0 0
    %1833 = vmatprep.subr.bf16.mxu0 0
    %1834 = vmatpush2.bf16.msra.mxu0 0
    %1835 = vmatprep.subr.bf16.mxu0 0
    %1836 = vmatpush2.bf16.msra.mxu0 0
    %1837 = vmatprep.subr.bf16.mxu0 0
    %1838 = vmatpush2.bf16.msra.mxu0 0
    %1839 = vmatprep.mubr.bf16.mxu0 0
    %1840 = vmatmul.mubr.bf16.gmra.mxu0 %v1796
    %v1841 = vpop.f32.mrf.mxu0
    %v1842 = vadd.f32 %v1781, %v1841
    %v1843 = vpop.f32.mrf.mxu0
    %v1844 = vpop.f32.mrf.mxu0
    %v1845 = vadd.f32 %v1781, %v1844
    %v1846 = vpop.f32.mrf.mxu0
    %1847 = vmatprep.mubr.bf16.mxu0 0
    %1848 = vmatmul.mubr.bf16.gmra.mxu0 %v1799
    %v1849 = vpop.f32.mrf.mxu0
    %v1850 = vadd.f32 %v1781, %v1849
    %v1851 = vpop.f32.mrf.mxu0
    %v1852 = vpop.f32.mrf.mxu0
    %v1853 = vadd.f32 %v1781, %v1852
    %v1854 = vpop.f32.mrf.mxu0
    %1855 = vmatprep.mubr.bf16.mxu0 0
    %1856 = vmatmul.mubr.bf16.gmra.mxu0 %v1802
    %v1857 = vpop.f32.mrf.mxu0
    %v1858 = vadd.f32 %v1781, %v1857
    %v1859 = vpop.f32.mrf.mxu0
    %v1860 = vpop.f32.mrf.mxu0
    %v1861 = vadd.f32 %v1781, %v1860
    %v1862 = vpop.f32.mrf.mxu0
    %1863 = vmatprep.mubr.bf16.mxu0 0
    %1864 = vmatmul.mubr.bf16.gmra.mxu0 %v1805
    %v1865 = vpop.f32.mrf.mxu0
    %v1866 = vadd.f32 %v1781, %v1865
    %v1867 = vpop.f32.mrf.mxu0
    %v1868 = vpop.f32.mrf.mxu0
    %v1869 = vadd.f32 %v1781, %v1868
    %v1870 = vpop.f32.mrf.mxu0
    %1871 = vdwg.mxu0
    %v1872 = vadd.f32 %v932, %v1842
    %v1873 = vadd.f32 %v935, %v1845
    %v1874 = vadd.f32 %v940, %v1850
    %v1875 = vadd.f32 %v943, %v1853
    %v1876 = vadd.f32 %v948, %v1858
    %v1877 = vadd.f32 %v951, %v1861
    %v1878 = vadd.f32 %v956, %v1866
    %v1879 = vadd.f32 %v959, %v1869
    %1880 = vst [vmem:[#allocation11] sm:$0xff] %v1872
    %1881 = vst [vmem:[#allocation11 + $0x8] sm:$0xff] %v1873
    %1882 = vst [vmem:[#allocation11 + $0x10] sm:$0xff] %v1874
    %1883 = vst [vmem:[#allocation11 + $0x18] sm:$0xff] %v1875
    %1884 = vst [vmem:[#allocation11 + $0x20] sm:$0xff] %v1876
    %1885 = vst [vmem:[#allocation11 + $0x28] sm:$0xff] %v1877
    %1886 = vst [vmem:[#allocation11 + $0x30] sm:$0xff] %v1878
    %1887 = vst [vmem:[#allocation11 + $0x38] sm:$0xff] %v1879
    // Predicated region
    $region42: #{tpu_custom_call.1} parent=1 // pred_check
      _
    $region43: #{tpu_custom_call.1} parent=1 // pred_check_branch
      %1889 = sbr.rel (0) target = $region45
    $region44: #{tpu_custom_call.1} parent=1 // pred_region
      %s1890 = sadd.s32 0, 0
      %s1891 = smul.u32 8, %s1890
      %s1893 = ssub.s32 1024, 1024
      %1894 = vsyncadd [#allocation8], %s1893
      %s1895 = smul.addr %s1891, 128
      %s1896 = scalar_lea.hbm %s7, %s1895
      %s1897 = sshll.u32 [#allocation11], 4
      %s1898 = int_to_ptr.vmem [resolvable:$true] %s1897
      %1903 = dma.vmem_to_hbm [thread:$0]  %s1898, 1024, %s1896, [#allocation8], 128, 128, 8
    $region45: #{tpu_custom_call.1} parent=1 // pred_fallthru
      _
    // Predicated region
    $region46: #{tpu_custom_call.1} parent=1 // pred_check
      _
    $region47: #{tpu_custom_call.1} parent=1 // pred_check_branch
      %1905 = sbr.rel (0) target = $region49
    $region48: #{tpu_custom_call.1} parent=1 // pred_region
      %1906 = dma.done [#allocation8], 1024
    $region49: #{tpu_custom_call.1} parent=1 // pred_fallthru
      _
    %1907 = vsyncpa [#allocation7], 1
    %1908 = vsyncpa [#allocation10], 1
    %1909 = vsyncpa [#allocation8], 1

</llo_original>
